<compile_context>
chip_gen: v7x
topology: tpu7x:2x2x1
jax: 0.10.0
libtpu: 0.0.40
codegen_flags: <defaults>
</compile_context>

<pallas_src>
import functools
import numpy as np
import jax
import jax.numpy as jnp
from jax.experimental import pallas as pl
from jax.experimental.pallas import tpu as pltpu

LANE = 128      # TPU vreg lane width  -> feature dims padded to multiples of this
SUBLANE = 8     # TPU vreg sublane width -> row / batch dims padded to multiples of this
MXU_BF16 = False  # set True on v5e/v6e: bf16 MXU inputs, f32 accumulate + f32 elementwise
VMEM_LIMIT = 32 * 1024 * 1024


# ----------------------------- small helpers ---------------------------------

def _rup(x, m):
    return ((x + m - 1) // m) * m


def _pad_axis(x, target, axis):
    pad = target - x.shape[axis]
    if pad <= 0:
        return x
    widths = [(0, 0)] * x.ndim
    widths[axis] = (0, pad)
    return jnp.pad(x, widths)


def _mxu_dot(a, b):
    if MXU_BF16:
        a = a.astype(jnp.bfloat16)
        b = b.astype(jnp.bfloat16)
    return jnp.dot(a, b, preferred_element_type=jnp.float32)


# ----------------------------- Pallas kernels --------------------------------

def _linear_kernel(x_ref, w_ref, b_ref, o_ref, *, activation):
    y = _mxu_dot(x_ref[...], w_ref[...]) + b_ref[...]
    if activation == "relu":
        y = jnp.maximum(y, 0.0)
    o_ref[...] = y


def _embed_gate_kernel(x_ref, w1_ref, b1_ref, wih_ref, bih_ref, xg_ref):
    # fused: relu(x @ w1 + b1) @ wih + bih   (linear1 + layer-0 input projection)
    emb = jnp.maximum(_mxu_dot(x_ref[...], w1_ref[...]) + b1_ref[...], 0.0)
    xg_ref[...] = _mxu_dot(emb, wih_ref[...]) + bih_ref[...]


def _head_kernel(h_ref, m_ref, w2a_ref, b2a_ref, w2b_ref, b2b_ref, o_ref):
    # fused: pad_packed mask + Linear -> ReLU -> Linear
    hm = h_ref[...] * m_ref[...]
    t = jnp.maximum(_mxu_dot(hm, w2a_ref[...]) + b2a_ref[...], 0.0)
    o_ref[...] = _mxu_dot(t, w2b_ref[...]) + b2b_ref[...]


def _gru_seq_kernel(xg_ref, h0_ref, whh_ref, bhh_ref, out_ref, h_scratch):
    # One full GRU layer over time; grid=(T,) "arbitrary", h carried in VMEM scratch.
    # PyTorch gate order (r, z, n):
    #   r = sigmoid(xg_r + hg_r); z = sigmoid(xg_z + hg_z)
    #   n = tanh(xg_n + r * hg_n); h' = (1 - z) * n + z * h
    Hp = h0_ref.shape[-1]

    @pl.when(pl.program_id(0) == 0)
    def _():
        h_scratch[...] = h0_ref[...]

    h_prev = h_scratch[...]
    hg = _mxu_dot(h_prev, whh_ref[...]) + bhh_ref[...]
    xg = xg_ref[0]
    r = jax.nn.sigmoid(xg[:, 0:Hp] + hg[:, 0:Hp])
    z = jax.nn.sigmoid(xg[:, Hp:2 * Hp] + hg[:, Hp:2 * Hp])
    n = jnp.tanh(xg[:, 2 * Hp:3 * Hp] + r * hg[:, 2 * Hp:3 * Hp])
    h_new = (1.0 - z) * n + z * h_prev
    h_scratch[...] = h_new
    out_ref[0] = h_new


# ----------------------------- pallas_call wrappers --------------------------

def _row_grid(n_rows):
    """(padded_rows, tile): tile is a multiple of 8, <=512 (v7x VMEM budget), and
    chosen so there are >=2 tiles when possible (shards across v7x's 2 TCs)."""
    if n_rows <= SUBLANE:
        return SUBLANE, SUBLANE
    tile = min(512, max(SUBLANE, _rup(n_rows, 2 * SUBLANE) // 2))
    return _rup(n_rows, tile), tile


def _tiled_call(kernel, n_rows, row_inputs, const_inputs, out_dim):
    """Row-tiled matmul-style kernel: row_inputs are (n_rows, d) arrays tiled along
    rows; const_inputs (weights/biases) stay whole in VMEM.  Returns (n_rows, out_dim)."""
    n_pad, tile = _row_grid(n_rows)
    row_inputs = [_pad_axis(x, n_pad, 0) for x in row_inputs]
    in_specs = (
        [pl.BlockSpec((tile, x.shape[1]), lambda i: (i, 0)) for x in row_inputs]
        + [pl.BlockSpec(c.shape, lambda i, nd=c.ndim: (0,) * nd) for c in const_inputs]
    )
    out = pl.pallas_call(
        kernel,
        out_shape=jax.ShapeDtypeStruct((n_pad, out_dim), jnp.float32),
        grid=(n_pad // tile,),
        in_specs=in_specs,
        out_specs=pl.BlockSpec((tile, out_dim), lambda i: (i, 0)),
        compiler_params=pltpu.CompilerParams(
            dimension_semantics=("parallel",),
            vmem_limit_bytes=VMEM_LIMIT),
    )(*row_inputs, *const_inputs)
    return out[:n_rows]


def gru_layer(xg, h0, whh, bhh):
    """xg: (T, Bp, 3*Hp) precomputed input gates; h0: (Bp, Hp) -> (T, Bp, Hp)."""
    T, Bp, G = xg.shape
    Hp = h0.shape[-1]
    return pl.pallas_call(
        _gru_seq_kernel,
        out_shape=jax.ShapeDtypeStruct((T, Bp, Hp), jnp.float32),
        grid=(T,),
        in_specs=[
            pl.BlockSpec((1, Bp, G), lambda t: (t, 0, 0)),   # streamed per step
            pl.BlockSpec((Bp, Hp), lambda t: (0, 0)),        # resident
            pl.BlockSpec((Hp, G), lambda t: (0, 0)),         # resident
            pl.BlockSpec((1, G), lambda t: (0, 0)),          # resident
        ],
        out_specs=pl.BlockSpec((1, Bp, Hp), lambda t: (t, 0, 0)),
        scratch_shapes=[pltpu.VMEM((Bp, Hp), jnp.float32)],  # carried hidden state
        compiler_params=pltpu.CompilerParams(
            dimension_semantics=("arbitrary",),
            vmem_limit_bytes=VMEM_LIMIT),
    )(xg, h0, whh, bhh)


# ----------------------------- AGRNNCell forward ------------------------------

def agrnn_cell_forward(params, inputs, h0, sequence_len, outputs_dim):
    """AGRNNCell.forward with pack=True.
    inputs: (B, T, inputs_dim), h0: (num_layers, B, hidden_dim),
    sequence_len: static tuple of ints (sorted descending, as pack_padded requires).
    Returns (B, max(sequence_len), outputs_dim)."""
    B, T, _ = inputs.shape
    L = len(params["gru"])
    Hp = params["gru"][0]["whh"].shape[0]
    Bp = _rup(B, SUBLANE)
    Dp = params["w1"].shape[0]
    Op = params["w2b"].shape[1]

    # time-major, batch- and lane-padded input
    x = jnp.transpose(inputs, (1, 0, 2))          # (T, B, Din)
    x = _pad_axis(_pad_axis(x, Bp, 1), Dp, 2)     # (T, Bp, Dp)
    x2 = x.reshape(T * Bp, Dp)

    # fused embed (linear1 + ReLU) + layer-0 input-to-hidden projection
    g0 = params["gru"][0]
    xg = _tiled_call(_embed_gate_kernel, T * Bp, [x2],
                     [params["w1"], params["b1"], g0["wih"], g0["bih"]], 3 * Hp)
    xg = xg.reshape(T, Bp, 3 * Hp)

    # GRU layers: one fused pallas_call per layer over grid=(T,)
    h0p = _pad_axis(_pad_axis(h0, Bp, 1), Hp, 2)  # (L, Bp, Hp)
    layer_out = gru_layer(xg, h0p[0], g0["whh"], g0["bhh"])
    for l in range(1, L):
        gl = params["gru"][l]
        xg_l = _tiled_call(functools.partial(_linear_kernel, activation="none"),
                           T * Bp, [layer_out.reshape(T * Bp, Hp)],
                           [gl["wih"], gl["bih"]], 3 * Hp)
        layer_out = gru_layer(xg_l.reshape(T, Bp, 3 * Hp), h0p[l],
                              gl["whh"], gl["bhh"])

    # pad_packed_sequence: zero positions with t >= len(b), trim to T_max.
    seq = np.asarray(sequence_len, dtype=np.int32)
    t_max = int(seq.max())
    mask_np = (np.arange(T)[:, None] < seq[None, :]).astype(np.float32)  # (T, B)
    mask_np = np.pad(mask_np, ((0, 0), (0, Bp - B)))                     # (T, Bp)
    mask = jnp.asarray(mask_np).reshape(T * Bp, 1)

    # fused head: mask + linear2 (Linear -> ReLU -> Linear)
    y = _tiled_call(_head_kernel, T * Bp,
                    [layer_out.reshape(T * Bp, Hp), mask],
                    [params["w2a"], params["b2a"], params["w2b"], params["b2b"]], Op)
    y = jnp.transpose(y.reshape(T, Bp, Op), (1, 0, 2))
    return y[:B, :t_max, :outputs_dim]


# ----------------------------- parameter init (padded) ------------------------

def _xavier(key, shape, gain):
    fan_in, fan_out = shape
    bound = gain * float(np.sqrt(6.0 / (fan_in + fan_out)))
    return jax.random.uniform(key, shape, jnp.float32, -bound, bound)


def init_cell_params(key, inputs_dim, embedded_dim, outputs_dim, hidden_dim, num_layers):
    """Matches AGRNNCell init: Linear weights xavier(relu gain), GRU weights
    xavier(sigmoid gain), GRU biases 0.25.  Weights stored pre-transposed (Din, Dout)
    and zero-padded so every feature dim is a multiple of 128 (per-gate for the GRU)."""
    ks = jax.random.split(key, 6 + 2 * num_layers)
    relu_gain = float(np.sqrt(2.0))
    sig_gain = 1.0
    Dp, Ep = _rup(inputs_dim, LANE), _rup(embedded_dim, LANE)
    Hp, Op = _rup(hidden_dim, LANE), _rup(outputs_dim, LANE)

    def padw(w, rows_p, cols_p):
        return _pad_axis(_pad_axis(w, rows_p, 0), cols_p, 1)

    def lin_bias(k, d, dp):
        return _pad_axis(jax.random.uniform(k, (1, d), jnp.float32, -0.1, 0.1), dp, 1)

    p = {
        "w1": padw(_xavier(ks[0], (inputs_dim, embedded_dim), relu_gain), Dp, Ep),
        "b1": lin_bias(ks[1], embedded_dim, Ep),
        "w2a": padw(_xavier(ks[2], (hidden_dim, embedded_dim), relu_gain), Hp, Ep),
        "b2a": lin_bias(ks[3], embedded_dim, Ep),
        "w2b": padw(_xavier(ks[4], (embedded_dim, outputs_dim), relu_gain), Ep, Op),
        "b2b": lin_bias(ks[5], outputs_dim, Op),
    }

    def pad_gates(w, rows, rows_p):
        # (rows, 3H) -> pad each (r,z,n) block to Hp lanes -> (rows_p, 3*Hp)
        w3 = _pad_axis(w.reshape(rows, 3, hidden_dim), Hp, 2).reshape(rows, 3 * Hp)
        return _pad_axis(w3, rows_p, 0)

    gru = []
    for l in range(num_layers):
        in_l = embedded_dim if l == 0 else hidden_dim
        in_lp = Ep if l == 0 else Hp
        wih = _xavier(ks[6 + 2 * l], (in_l, 3 * hidden_dim), sig_gain)
        whh = _xavier(ks[7 + 2 * l], (hidden_dim, 3 * hidden_dim), sig_gain)
        bias = jnp.full((1, 3, hidden_dim), 0.25, jnp.float32)
        bias_p = _pad_axis(bias, Hp, 2).reshape(1, 3 * Hp)
        gru.append({
            "wih": pad_gates(wih, in_l, in_lp),
            "whh": pad_gates(whh, hidden_dim, Hp),
            "bih": bias_p,
            "bhh": bias_p,
        })
    p["gru"] = gru
    return p


# ----------------------------- main -------------------------------------------

if __name__ == "__main__":
    inputs_dim, embedded_dim, outputs_dim, hidden_dim, num_layers = 8, 16, 16, 32, 2
    B, T = 4, 8
    sequence_len = (8, 6, 4, 3)   # sorted descending, as pack_padded_sequence requires

    key = jax.random.PRNGKey(0)
    k_par, k_in = jax.random.split(key)
    params = init_cell_params(k_par, inputs_dim, embedded_dim, outputs_dim,
                              hidden_dim, num_layers)
    inputs = jax.random.normal(k_in, (B, T, inputs_dim), jnp.float32)
    h0 = jnp.zeros((num_layers, B, hidden_dim), jnp.float32)   # init_hidden(B)

    fwd = jax.jit(agrnn_cell_forward, static_argnames=("sequence_len", "outputs_dim"))
    out = jax.block_until_ready(
        fwd(params, inputs, h0, sequence_len=sequence_len, outputs_dim=outputs_dim))

    assert out.shape == (B, max(sequence_len), outputs_dim)
    assert np.all(np.isfinite(np.asarray(out)))
    print("KERNEL_OK")
</pallas_src>

<mosaic_0001>
module attributes {stable_mosaic.version = 11 : i64} {
  func.func @_embed_gate_kernel(%arg0: i32, %arg1: memref<32x128xf32, #tpu.memory_space<vmem>>, %arg2: memref<128x128xf32, #tpu.memory_space<vmem>>, %arg3: memref<1x128xf32, #tpu.memory_space<vmem>>, %arg4: memref<128x384xf32, #tpu.memory_space<vmem>>, %arg5: memref<1x384xf32, #tpu.memory_space<vmem>>, %arg6: memref<32x384xf32, #tpu.memory_space<vmem>>) attributes {dimension_semantics = [#tpu.dimension_semantics<parallel>], iteration_bounds = array<i64: 2>, scalar_prefetch = 0 : i64, scratch_operands = 0 : i64, tpu.core_type = #tpu.core_type<tc>, window_params = [{transform_indices = @transform_0, window_bounds = array<i64: 32, 128>}, {pipeline_mode = #tpu.pipeline_mode<synchronous>, transform_indices = @transform_1, window_bounds = array<i64: 128, 128>}, {pipeline_mode = #tpu.pipeline_mode<synchronous>, transform_indices = @transform_2, window_bounds = array<i64: 1, 128>}, {pipeline_mode = #tpu.pipeline_mode<synchronous>, transform_indices = @transform_3, window_bounds = array<i64: 128, 384>}, {pipeline_mode = #tpu.pipeline_mode<synchronous>, transform_indices = @transform_4, window_bounds = array<i64: 1, 384>}, {transform_indices = @transform_5, window_bounds = array<i64: 32, 384>}]} {
    %c0 = arith.constant 0 : index
    %c0_0 = arith.constant 0 : index
    %0 = vector.load %arg1[%c0, %c0_0] : memref<32x128xf32, #tpu.memory_space<vmem>>, vector<32x128xf32>
    %c0_1 = arith.constant 0 : index
    %c0_2 = arith.constant 0 : index
    %1 = vector.load %arg2[%c0_1, %c0_2] : memref<128x128xf32, #tpu.memory_space<vmem>>, vector<128x128xf32>
    %cst = arith.constant dense<0.000000e+00> : vector<32x128xf32>
    %2 = tpu.matmul %0, %1, %cst {dimension_numbers = #tpu.dot_dimension_numbers<[1], [0], [0], [1], [0, 0, 1, 1], [], []>} : vector<32x128xf32>, vector<128x128xf32>, vector<32x128xf32> -> vector<32x128xf32>
    %c0_3 = arith.constant 0 : index
    %c0_4 = arith.constant 0 : index
    %3 = vector.load %arg3[%c0_3, %c0_4] : memref<1x128xf32, #tpu.memory_space<vmem>>, vector<1x128xf32>
    %4 = vector.broadcast %3 : vector<1x128xf32> to vector<32x128xf32>
    %5 = arith.addf %2, %4 : vector<32x128xf32>
    %cst_5 = arith.constant 0.000000e+00 : f32
    %6 = vector.broadcast %cst_5 : f32 to vector<32x128xf32>
    %7 = arith.maximumf %5, %6 : vector<32x128xf32>
    %c0_6 = arith.constant 0 : index
    %c0_7 = arith.constant 0 : index
    %8 = vector.load %arg4[%c0_6, %c0_7] : memref<128x384xf32, #tpu.memory_space<vmem>>, vector<128x384xf32>
    %cst_8 = arith.constant dense<0.000000e+00> : vector<32x384xf32>
    %9 = tpu.matmul %7, %8, %cst_8 {dimension_numbers = #tpu.dot_dimension_numbers<[1], [0], [0], [1], [0, 0, 1, 1], [], []>} : vector<32x128xf32>, vector<128x384xf32>, vector<32x384xf32> -> vector<32x384xf32>
    %c0_9 = arith.constant 0 : index
    %c0_10 = arith.constant 0 : index
    %10 = vector.load %arg5[%c0_9, %c0_10] : memref<1x384xf32, #tpu.memory_space<vmem>>, vector<1x384xf32>
    %11 = vector.broadcast %10 : vector<1x384xf32> to vector<32x384xf32>
    %12 = arith.addf %9, %11 : vector<32x384xf32>
    %c0_11 = arith.constant 0 : index
    %c0_12 = arith.constant 0 : index
    %13 = vector.load %arg6[%c0_11, %c0_12] : memref<32x384xf32, #tpu.memory_space<vmem>>, vector<32x384xf32>
    tpu.vector_store %arg6[%c0_11, %c0_12], %12 {strides = array<i32>} : memref<32x384xf32, #tpu.memory_space<vmem>>, vector<32x384xf32>,
    return
  }
  func.func @transform_0(%arg0: i32) -> (i32, i32) {
    %c0_i32 = arith.constant 0 : i32
    %c0_i32_0 = arith.constant 0 : i32
    return %arg0, %c0_i32 : i32, i32
  }
  func.func @transform_1(%arg0: i32) -> (i32, i32) {
    %c0_i32 = arith.constant 0 : i32
    %c0_i32_0 = arith.constant 0 : i32
    %c0_i32_1 = arith.constant 0 : i32
    return %c0_i32, %c0_i32_0 : i32, i32
  }
  func.func @transform_2(%arg0: i32) -> (i32, i32) {
    %c0_i32 = arith.constant 0 : i32
    %c0_i32_0 = arith.constant 0 : i32
    %c0_i32_1 = arith.constant 0 : i32
    return %c0_i32, %c0_i32_0 : i32, i32
  }
  func.func @transform_3(%arg0: i32) -> (i32, i32) {
    %c0_i32 = arith.constant 0 : i32
    %c0_i32_0 = arith.constant 0 : i32
    %c0_i32_1 = arith.constant 0 : i32
    return %c0_i32, %c0_i32_0 : i32, i32
  }
  func.func @transform_4(%arg0: i32) -> (i32, i32) {
    %c0_i32 = arith.constant 0 : i32
    %c0_i32_0 = arith.constant 0 : i32
    %c0_i32_1 = arith.constant 0 : i32
    return %c0_i32, %c0_i32_0 : i32, i32
  }
  func.func @transform_5(%arg0: i32) -> (i32, i32) {
    %c0_i32 = arith.constant 0 : i32
    %c0_i32_0 = arith.constant 0 : i32
    return %arg0, %c0_i32 : i32, i32
  }
}

module attributes {stable_mosaic.version = 11 : i64} {
  func.func @_linear_kernel(%arg0: i32, %arg1: memref<32x128xf32, #tpu.memory_space<vmem>>, %arg2: memref<128x384xf32, #tpu.memory_space<vmem>>, %arg3: memref<1x384xf32, #tpu.memory_space<vmem>>, %arg4: memref<32x384xf32, #tpu.memory_space<vmem>>) attributes {dimension_semantics = [#tpu.dimension_semantics<parallel>], iteration_bounds = array<i64: 2>, scalar_prefetch = 0 : i64, scratch_operands = 0 : i64, tpu.core_type = #tpu.core_type<tc>, window_params = [{transform_indices = @transform_0, window_bounds = array<i64: 32, 128>}, {pipeline_mode = #tpu.pipeline_mode<synchronous>, transform_indices = @transform_1, window_bounds = array<i64: 128, 384>}, {pipeline_mode = #tpu.pipeline_mode<synchronous>, transform_indices = @transform_2, window_bounds = array<i64: 1, 384>}, {transform_indices = @transform_3, window_bounds = array<i64: 32, 384>}]} {
    %c0 = arith.constant 0 : index
    %c0_0 = arith.constant 0 : index
    %0 = vector.load %arg1[%c0, %c0_0] : memref<32x128xf32, #tpu.memory_space<vmem>>, vector<32x128xf32>
    %c0_1 = arith.constant 0 : index
    %c0_2 = arith.constant 0 : index
    %1 = vector.load %arg2[%c0_1, %c0_2] : memref<128x384xf32, #tpu.memory_space<vmem>>, vector<128x384xf32>
    %cst = arith.constant dense<0.000000e+00> : vector<32x384xf32>
    %2 = tpu.matmul %0, %1, %cst {dimension_numbers = #tpu.dot_dimension_numbers<[1], [0], [0], [1], [0, 0, 1, 1], [], []>} : vector<32x128xf32>, vector<128x384xf32>, vector<32x384xf32> -> vector<32x384xf32>
    %c0_3 = arith.constant 0 : index
    %c0_4 = arith.constant 0 : index
    %3 = vector.load %arg3[%c0_3, %c0_4] : memref<1x384xf32, #tpu.memory_space<vmem>>, vector<1x384xf32>
    %4 = vector.broadcast %3 : vector<1x384xf32> to vector<32x384xf32>
    %5 = arith.addf %2, %4 : vector<32x384xf32>
    %c0_5 = arith.constant 0 : index
    %c0_6 = arith.constant 0 : index
    %6 = vector.load %arg4[%c0_5, %c0_6] : memref<32x384xf32, #tpu.memory_space<vmem>>, vector<32x384xf32>
    tpu.vector_store %arg4[%c0_5, %c0_6], %5 {strides = array<i32>} : memref<32x384xf32, #tpu.memory_space<vmem>>, vector<32x384xf32>,
    return
  }
  func.func @transform_0(%arg0: i32) -> (i32, i32) {
    %c0_i32 = arith.constant 0 : i32
    %c0_i32_0 = arith.constant 0 : i32
    return %arg0, %c0_i32 : i32, i32
  }
  func.func @transform_1(%arg0: i32) -> (i32, i32) {
    %c0_i32 = arith.constant 0 : i32
    %c0_i32_0 = arith.constant 0 : i32
    %c0_i32_1 = arith.constant 0 : i32
    return %c0_i32, %c0_i32_0 : i32, i32
  }
  func.func @transform_2(%arg0: i32) -> (i32, i32) {
    %c0_i32 = arith.constant 0 : i32
    %c0_i32_0 = arith.constant 0 : i32
    %c0_i32_1 = arith.constant 0 : i32
    return %c0_i32, %c0_i32_0 : i32, i32
  }
  func.func @transform_3(%arg0: i32) -> (i32, i32) {
    %c0_i32 = arith.constant 0 : i32
    %c0_i32_0 = arith.constant 0 : i32
    return %arg0, %c0_i32 : i32, i32
  }
}

module attributes {stable_mosaic.version = 11 : i64} {
  func.func @_gru_seq_kernel(%arg0: i32, %arg1: memref<1x8x384xf32, #tpu.memory_space<vmem>>, %arg2: memref<8x128xf32, #tpu.memory_space<vmem>>, %arg3: memref<128x384xf32, #tpu.memory_space<vmem>>, %arg4: memref<1x384xf32, #tpu.memory_space<vmem>>, %arg5: memref<1x8x128xf32, #tpu.memory_space<vmem>>, %arg6: memref<8x128xf32, #tpu.memory_space<vmem>>) attributes {dimension_semantics = [#tpu.dimension_semantics<arbitrary>], iteration_bounds = array<i64: 8>, scalar_prefetch = 0 : i64, scratch_operands = 1 : i64, tpu.core_type = #tpu.core_type<tc>, window_params = [{transform_indices = @transform_0, window_bounds = array<i64: 1, 8, 384>}, {pipeline_mode = #tpu.pipeline_mode<synchronous>, transform_indices = @transform_1, window_bounds = array<i64: 8, 128>}, {pipeline_mode = #tpu.pipeline_mode<synchronous>, transform_indices = @transform_2, window_bounds = array<i64: 128, 384>}, {pipeline_mode = #tpu.pipeline_mode<synchronous>, transform_indices = @transform_3, window_bounds = array<i64: 1, 384>}, {transform_indices = @transform_4, window_bounds = array<i64: 1, 8, 128>}]} {
    %c0_i32 = arith.constant 0 : i32
    %0 = arith.cmpi eq, %arg0, %c0_i32 : i32
    %1 = arith.extui %0 : i1 to i32
    %c0_i32_0 = arith.constant 0 : i32
    %2 = arith.cmpi ne, %1, %c0_i32_0 : i32
    scf.if %2 {
      %c0_17 = arith.constant 0 : index
      %c0_18 = arith.constant 0 : index
      %41 = vector.load %arg2[%c0_17, %c0_18] : memref<8x128xf32, #tpu.memory_space<vmem>>, vector<8x128xf32>
      %c0_19 = arith.constant 0 : index
      %c0_20 = arith.constant 0 : index
      %42 = vector.load %arg6[%c0_19, %c0_20] : memref<8x128xf32, #tpu.memory_space<vmem>>, vector<8x128xf32>
      tpu.vector_store %arg6[%c0_19, %c0_20], %41 {strides = array<i32>} : memref<8x128xf32, #tpu.memory_space<vmem>>, vector<8x128xf32>,
    } else {
    }
    %c0 = arith.constant 0 : index
    %c0_1 = arith.constant 0 : index
    %3 = vector.load %arg6[%c0, %c0_1] : memref<8x128xf32, #tpu.memory_space<vmem>>, vector<8x128xf32>
    %c0_2 = arith.constant 0 : index
    %c0_3 = arith.constant 0 : index
    %4 = vector.load %arg3[%c0_2, %c0_3] : memref<128x384xf32, #tpu.memory_space<vmem>>, vector<128x384xf32>
    %cst = arith.constant dense<0.000000e+00> : vector<8x384xf32>
    %5 = tpu.matmul %3, %4, %cst {dimension_numbers = #tpu.dot_dimension_numbers<[1], [0], [0], [1], [0, 0, 1, 1], [], []>} : vector<8x128xf32>, vector<128x384xf32>, vector<8x384xf32> -> vector<8x384xf32>
    %c0_4 = arith.constant 0 : index
    %c0_5 = arith.constant 0 : index
    %6 = vector.load %arg4[%c0_4, %c0_5] : memref<1x384xf32, #tpu.memory_space<vmem>>, vector<1x384xf32>
    %7 = vector.broadcast %6 : vector<1x384xf32> to vector<8x384xf32>
    %8 = arith.addf %5, %7 : vector<8x384xf32>
    %c0_6 = arith.constant 0 : index
    %c0_7 = arith.constant 0 : index
    %c0_8 = arith.constant 0 : index
    %9 = vector.load %arg1[%c0_6, %c0_7, %c0_8] : memref<1x8x384xf32, #tpu.memory_space<vmem>>, vector<1x8x384xf32>
    %10 = vector.shape_cast %9 : vector<1x8x384xf32> to vector<8x384xf32>
    %11 = vector.extract_strided_slice %10 {offsets = [0, 0], sizes = [8, 128], strides = [1, 1]} : vector<8x384xf32> to vector<8x128xf32>
    %12 = vector.extract_strided_slice %8 {offsets = [0, 0], sizes = [8, 128], strides = [1, 1]} : vector<8x384xf32> to vector<8x128xf32>
    %13 = arith.addf %11, %12 : vector<8x128xf32>
    %14 = arith.negf %13 : vector<8x128xf32>
    %15 = math.exp %14 : vector<8x128xf32>
    %cst_9 = arith.constant 1.000000e+00 : f32
    %16 = vector.broadcast %cst_9 : f32 to vector<8x128xf32>
    %17 = arith.addf %16, %15 : vector<8x128xf32>
    %18 = arith.divf %16, %17 : vector<8x128xf32>
    %19 = vector.extract_strided_slice %10 {offsets = [0, 128], sizes = [8, 128], strides = [1, 1]} : vector<8x384xf32> to vector<8x128xf32>
    %20 = vector.extract_strided_slice %8 {offsets = [0, 128], sizes = [8, 128], strides = [1, 1]} : vector<8x384xf32> to vector<8x128xf32>
    %21 = arith.addf %19, %20 : vector<8x128xf32>
    %22 = arith.negf %21 : vector<8x128xf32>
    %23 = math.exp %22 : vector<8x128xf32>
    %cst_10 = arith.constant 1.000000e+00 : f32
    %24 = vector.broadcast %cst_10 : f32 to vector<8x128xf32>
    %25 = arith.addf %24, %23 : vector<8x128xf32>
    %26 = arith.divf %24, %25 : vector<8x128xf32>
    %27 = vector.extract_strided_slice %10 {offsets = [0, 256], sizes = [8, 128], strides = [1, 1]} : vector<8x384xf32> to vector<8x128xf32>
    %28 = vector.extract_strided_slice %8 {offsets = [0, 256], sizes = [8, 128], strides = [1, 1]} : vector<8x384xf32> to vector<8x128xf32>
    %29 = arith.mulf %18, %28 : vector<8x128xf32>
    %30 = arith.addf %27, %29 : vector<8x128xf32>
    %31 = math.tanh %30 : vector<8x128xf32>
    %cst_11 = arith.constant 1.000000e+00 : f32
    %32 = vector.broadcast %cst_11 : f32 to vector<8x128xf32>
    %33 = arith.subf %32, %26 : vector<8x128xf32>
    %34 = arith.mulf %33, %31 : vector<8x128xf32>
    %35 = arith.mulf %26, %3 : vector<8x128xf32>
    %36 = arith.addf %34, %35 : vector<8x128xf32>
    %c0_12 = arith.constant 0 : index
    %c0_13 = arith.constant 0 : index
    %37 = vector.load %arg6[%c0_12, %c0_13] : memref<8x128xf32, #tpu.memory_space<vmem>>, vector<8x128xf32>
    tpu.vector_store %arg6[%c0_12, %c0_13], %36 {strides = array<i32>} : memref<8x128xf32, #tpu.memory_space<vmem>>, vector<8x128xf32>,
    %c0_14 = arith.constant 0 : index
    %c0_15 = arith.constant 0 : index
    %c0_16 = arith.constant 0 : index
    %38 = vector.load %arg5[%c0_14, %c0_15, %c0_16] : memref<1x8x128xf32, #tpu.memory_space<vmem>>, vector<1x8x128xf32>
    %39 = vector.shape_cast %38 : vector<1x8x128xf32> to vector<8x128xf32>
    %40 = vector.shape_cast %36 : vector<8x128xf32> to vector<1x8x128xf32>
    tpu.vector_store %arg5[%c0_14, %c0_15, %c0_16], %40 {strides = array<i32>} : memref<1x8x128xf32, #tpu.memory_space<vmem>>, vector<1x8x128xf32>,
    return
  }
  func.func @transform_0(%arg0: i32) -> (i32, i32, i32) {
    %c0_i32 = arith.constant 0 : i32
    %c0_i32_0 = arith.constant 0 : i32
    %c0_i32_1 = arith.constant 0 : i32
    return %arg0, %c0_i32, %c0_i32_0 : i32, i32, i32
  }
  func.func @transform_1(%arg0: i32) -> (i32, i32) {
    %c0_i32 = arith.constant 0 : i32
    %c0_i32_0 = arith.constant 0 : i32
    %c0_i32_1 = arith.constant 0 : i32
    return %c0_i32, %c0_i32_0 : i32, i32
  }
  func.func @transform_2(%arg0: i32) -> (i32, i32) {
    %c0_i32 = arith.constant 0 : i32
    %c0_i32_0 = arith.constant 0 : i32
    %c0_i32_1 = arith.constant 0 : i32
    return %c0_i32, %c0_i32_0 : i32, i32
  }
  func.func @transform_3(%arg0: i32) -> (i32, i32) {
    %c0_i32 = arith.constant 0 : i32
    %c0_i32_0 = arith.constant 0 : i32
    %c0_i32_1 = arith.constant 0 : i32
    return %c0_i32, %c0_i32_0 : i32, i32
  }
  func.func @transform_4(%arg0: i32) -> (i32, i32, i32) {
    %c0_i32 = arith.constant 0 : i32
    %c0_i32_0 = arith.constant 0 : i32
    %c0_i32_1 = arith.constant 0 : i32
    return %arg0, %c0_i32, %c0_i32_0 : i32, i32, i32
  }
}

module attributes {stable_mosaic.version = 11 : i64} {
  func.func @_head_kernel(%arg0: i32, %arg1: memref<32x128xf32, #tpu.memory_space<vmem>>, %arg2: memref<32x1xf32, #tpu.memory_space<vmem>>, %arg3: memref<128x128xf32, #tpu.memory_space<vmem>>, %arg4: memref<1x128xf32, #tpu.memory_space<vmem>>, %arg5: memref<128x128xf32, #tpu.memory_space<vmem>>, %arg6: memref<1x128xf32, #tpu.memory_space<vmem>>, %arg7: memref<32x128xf32, #tpu.memory_space<vmem>>) attributes {dimension_semantics = [#tpu.dimension_semantics<parallel>], iteration_bounds = array<i64: 2>, scalar_prefetch = 0 : i64, scratch_operands = 0 : i64, tpu.core_type = #tpu.core_type<tc>, window_params = [{transform_indices = @transform_0, window_bounds = array<i64: 32, 128>}, {transform_indices = @transform_1, window_bounds = array<i64: 32, 1>}, {pipeline_mode = #tpu.pipeline_mode<synchronous>, transform_indices = @transform_2, window_bounds = array<i64: 128, 128>}, {pipeline_mode = #tpu.pipeline_mode<synchronous>, transform_indices = @transform_3, window_bounds = array<i64: 1, 128>}, {pipeline_mode = #tpu.pipeline_mode<synchronous>, transform_indices = @transform_4, window_bounds = array<i64: 128, 128>}, {pipeline_mode = #tpu.pipeline_mode<synchronous>, transform_indices = @transform_5, window_bounds = array<i64: 1, 128>}, {transform_indices = @transform_6, window_bounds = array<i64: 32, 128>}]} {
    %c0 = arith.constant 0 : index
    %c0_0 = arith.constant 0 : index
    %0 = vector.load %arg1[%c0, %c0_0] : memref<32x128xf32, #tpu.memory_space<vmem>>, vector<32x128xf32>
    %c0_1 = arith.constant 0 : index
    %c0_2 = arith.constant 0 : index
    %1 = vector.load %arg2[%c0_1, %c0_2] : memref<32x1xf32, #tpu.memory_space<vmem>>, vector<32x1xf32>
    %2 = vector.broadcast %1 : vector<32x1xf32> to vector<32x128xf32>
    %3 = arith.mulf %0, %2 : vector<32x128xf32>
    %c0_3 = arith.constant 0 : index
    %c0_4 = arith.constant 0 : index
    %4 = vector.load %arg3[%c0_3, %c0_4] : memref<128x128xf32, #tpu.memory_space<vmem>>, vector<128x128xf32>
    %cst = arith.constant dense<0.000000e+00> : vector<32x128xf32>
    %5 = tpu.matmul %3, %4, %cst {dimension_numbers = #tpu.dot_dimension_numbers<[1], [0], [0], [1], [0, 0, 1, 1], [], []>} : vector<32x128xf32>, vector<128x128xf32>, vector<32x128xf32> -> vector<32x128xf32>
    %c0_5 = arith.constant 0 : index
    %c0_6 = arith.constant 0 : index
    %6 = vector.load %arg4[%c0_5, %c0_6] : memref<1x128xf32, #tpu.memory_space<vmem>>, vector<1x128xf32>
    %7 = vector.broadcast %6 : vector<1x128xf32> to vector<32x128xf32>
    %8 = arith.addf %5, %7 : vector<32x128xf32>
    %cst_7 = arith.constant 0.000000e+00 : f32
    %9 = vector.broadcast %cst_7 : f32 to vector<32x128xf32>
    %10 = arith.maximumf %8, %9 : vector<32x128xf32>
    %c0_8 = arith.constant 0 : index
    %c0_9 = arith.constant 0 : index
    %11 = vector.load %arg5[%c0_8, %c0_9] : memref<128x128xf32, #tpu.memory_space<vmem>>, vector<128x128xf32>
    %cst_10 = arith.constant dense<0.000000e+00> : vector<32x128xf32>
    %12 = tpu.matmul %10, %11, %cst_10 {dimension_numbers = #tpu.dot_dimension_numbers<[1], [0], [0], [1], [0, 0, 1, 1], [], []>} : vector<32x128xf32>, vector<128x128xf32>, vector<32x128xf32> -> vector<32x128xf32>
    %c0_11 = arith.constant 0 : index
    %c0_12 = arith.constant 0 : index
    %13 = vector.load %arg6[%c0_11, %c0_12] : memref<1x128xf32, #tpu.memory_space<vmem>>, vector<1x128xf32>
    %14 = vector.broadcast %13 : vector<1x128xf32> to vector<32x128xf32>
    %15 = arith.addf %12, %14 : vector<32x128xf32>
    %c0_13 = arith.constant 0 : index
    %c0_14 = arith.constant 0 : index
    %16 = vector.load %arg7[%c0_13, %c0_14] : memref<32x128xf32, #tpu.memory_space<vmem>>, vector<32x128xf32>
    tpu.vector_store %arg7[%c0_13, %c0_14], %15 {strides = array<i32>} : memref<32x128xf32, #tpu.memory_space<vmem>>, vector<32x128xf32>,
    return
  }
  func.func @transform_0(%arg0: i32) -> (i32, i32) {
    %c0_i32 = arith.constant 0 : i32
    %c0_i32_0 = arith.constant 0 : i32
    return %arg0, %c0_i32 : i32, i32
  }
  func.func @transform_1(%arg0: i32) -> (i32, i32) {
    %c0_i32 = arith.constant 0 : i32
    %c0_i32_0 = arith.constant 0 : i32
    return %arg0, %c0_i32 : i32, i32
  }
  func.func @transform_2(%arg0: i32) -> (i32, i32) {
    %c0_i32 = arith.constant 0 : i32
    %c0_i32_0 = arith.constant 0 : i32
    %c0_i32_1 = arith.constant 0 : i32
    return %c0_i32, %c0_i32_0 : i32, i32
  }
  func.func @transform_3(%arg0: i32) -> (i32, i32) {
    %c0_i32 = arith.constant 0 : i32
    %c0_i32_0 = arith.constant 0 : i32
    %c0_i32_1 = arith.constant 0 : i32
    return %c0_i32, %c0_i32_0 : i32, i32
  }
  func.func @transform_4(%arg0: i32) -> (i32, i32) {
    %c0_i32 = arith.constant 0 : i32
    %c0_i32_0 = arith.constant 0 : i32
    %c0_i32_1 = arith.constant 0 : i32
    return %c0_i32, %c0_i32_0 : i32, i32
  }
  func.func @transform_5(%arg0: i32) -> (i32, i32) {
    %c0_i32 = arith.constant 0 : i32
    %c0_i32_0 = arith.constant 0 : i32
    %c0_i32_1 = arith.constant 0 : i32
    return %c0_i32, %c0_i32_0 : i32, i32
  }
  func.func @transform_6(%arg0: i32) -> (i32, i32) {
    %c0_i32 = arith.constant 0 : i32
    %c0_i32_0 = arith.constant 0 : i32
    return %arg0, %c0_i32 : i32, i32
  }
}

</mosaic_0001>

<llo_original>
// kernel: agrnn_cell_forward.7
$region0: #{agrnn_cell_forward.7}
  #allocation0 [shape = 'u32[]', space=smem, size = 0x4, offset = 0x4, fixed_abs, tag = 'smem constant byte address 0x4 - core index']
  #allocation1 [shape = 'u32[144,128]{1,0:T(1,128)}', space=vmem, size = 0x12000, scoped, tag = 'internal scratch']
  %s0 = inlined_call_operand.vmem [shape: f32[64,128], index: 0, kind: input, shape index: {}]
  %s1 = inlined_call_operand.vmem [shape: f32[128,384], index: 1, kind: input, shape index: {}]
  %s2 = inlined_call_operand.vmem [shape: f32[1,384], index: 2, kind: input, shape index: {}]
  %s3 = inlined_call_operand.vmem [shape: f32[64,384], index: 3, kind: output, shape index: {}]
  %s4 = sld [smem:[#allocation0]]
  $region45: #{agrnn_cell_forward.7} parent=0
    _
  %s6 = ssub.s32 1, %s4
  %s7 = scalar_select 0, %s6, %s4
  loop: start=0, step=1, limit=4
  $region2: #{agrnn_cell_forward.7} parent=0 // loop_pre_header
    _
  $region3: #{agrnn_cell_forward.7} parent=0 // loop_header
    %s9 = sphi 0, %s13
    %p10 = scmp.ge.s32.totalorder %s9, 4
    %s19 = sphi 0, %s21
    %s22 = sphi 0, %s19
    %s23 = sphi 0, %s22
    %s39 = sphi 0, %s23
    %s43 = sphi 0, %s43
    %s45 = sphi 0, %s43
    %s46 = sphi 0, %s45
    %s60 = sphi 0, %s46
    %s64 = sphi 0, %s64
    %s66 = sphi 0, %s64
    %s67 = sphi 0, %s66
    %s81 = sphi 0, %s67
    %s87 = sphi 0, %s89
    %s90 = sphi 0, %s87
    %s91 = sphi 0, %s90
    %s107 = sphi 0, %s91
  $region4: #{agrnn_cell_forward.7} parent=0 // loop_header_branch
    %12 = sbr.rel (%p10) target = $region8
  $region5: #{agrnn_cell_forward.7} parent=0 // loop_body
    %s14 = ssub.s32 %s9, 1
    %s15 = ssub.s32 %s9, 2
    %s16 = sadd.s32 %s9, 1
    %s17 = ssub.s32 %s9, %s16
    %p18 = scmp.eq.s32.totalorder %s17, 0
    %s20 = sadd.s32 %s19, 1
    %s21 = scalar_select %p18, %s19, %s20
    %p24 = pneg %p18
    %p25 = scmp.eq.s32.totalorder %s9, 1
    %p26 = por %p24, %p25
    %p27 = scmp.ne.s32.totalorder %s19, %s22
    %p28 = scmp.eq.s32.totalorder %s9, 0
    %p29 = por %p27, %p28
    %p30 = scmp.ne.s32.totalorder %s19, %s22
    %p31 = scmp.eq.s32.totalorder %s14, 1
    %p32 = por %p30, %p31
    %p33 = scmp.ne.s32.totalorder %s22, %s23
    %p34 = scmp.eq.s32.totalorder %s14, 0
    %p35 = por %p33, %p34
    %p36 = scmp.ne.s32.totalorder %s22, %s23
    %p37 = scmp.eq.s32.totalorder %s15, 1
    %p38 = por %p36, %p37
    %p40 = scmp.ne.s32.totalorder %s23, %s39
    %p41 = scmp.eq.s32.totalorder %s15, 0
    %p42 = por %p40, %p41
    %s44 = sadd.s32 %s43, 1
    %p47 = scmp.eq.s32.totalorder %s9, 1
    %p48 = scmp.ne.s32.totalorder %s43, %s45
    %p49 = scmp.eq.s32.totalorder %s9, 0
    %p50 = por %p48, %p49
    %p51 = scmp.ne.s32.totalorder %s43, %s45
    %p52 = scmp.eq.s32.totalorder %s14, 1
    %p53 = por %p51, %p52
    %p54 = scmp.ne.s32.totalorder %s45, %s46
    %p55 = scmp.eq.s32.totalorder %s14, 0
    %p56 = por %p54, %p55
    %p57 = scmp.ne.s32.totalorder %s45, %s46
    %p58 = scmp.eq.s32.totalorder %s15, 1
    %p59 = por %p57, %p58
    %p61 = scmp.ne.s32.totalorder %s46, %s60
    %p62 = scmp.eq.s32.totalorder %s15, 0
    %p63 = por %p61, %p62
    %s65 = sadd.s32 %s64, 1
    %p68 = scmp.eq.s32.totalorder %s9, 1
    %p69 = scmp.ne.s32.totalorder %s64, %s66
    %p70 = scmp.eq.s32.totalorder %s9, 0
    %p71 = por %p69, %p70
    %p72 = scmp.ne.s32.totalorder %s64, %s66
    %p73 = scmp.eq.s32.totalorder %s14, 1
    %p74 = por %p72, %p73
    %p75 = scmp.ne.s32.totalorder %s66, %s67
    %p76 = scmp.eq.s32.totalorder %s14, 0
    %p77 = por %p75, %p76
    %p78 = scmp.ne.s32.totalorder %s66, %s67
    %p79 = scmp.eq.s32.totalorder %s15, 1
    %p80 = por %p78, %p79
    %p82 = scmp.ne.s32.totalorder %s67, %s81
    %p83 = scmp.eq.s32.totalorder %s15, 0
    %p84 = por %p82, %p83
    %s85 = ssub.s32 %s9, %s16
    %p86 = scmp.eq.s32.totalorder %s85, 0
    %s88 = sadd.s32 %s87, 1
    %s89 = scalar_select %p86, %s87, %s88
    %p92 = pneg %p86
    %p93 = scmp.eq.s32.totalorder %s9, 1
    %p94 = por %p92, %p93
    %p95 = scmp.ne.s32.totalorder %s87, %s90
    %p96 = scmp.eq.s32.totalorder %s9, 0
    %p97 = por %p95, %p96
    %p98 = scmp.ne.s32.totalorder %s87, %s90
    %p99 = scmp.eq.s32.totalorder %s14, 1
    %p100 = por %p98, %p99
    %p101 = scmp.ne.s32.totalorder %s90, %s91
    %p102 = scmp.eq.s32.totalorder %s14, 0
    %p103 = por %p101, %p102
    %p104 = scmp.ne.s32.totalorder %s90, %s91
    %p105 = scmp.eq.s32.totalorder %s15, 1
    %p106 = por %p104, %p105
    %p108 = scmp.ne.s32.totalorder %s91, %s107
    %p109 = scmp.eq.s32.totalorder %s15, 0
    %p110 = por %p108, %p109
    %p111 = scmp.le.s32.totalorder 1, %s9
    %p112 = scmp.lt.s32.totalorder %s9, 3
    %p113 = pnand %p111, %p112
    %p114 = pneg %p113
    // Predicated region
    $region9: #{agrnn_cell_forward.7} parent=5 // pred_check
      _
    $region10: #{agrnn_cell_forward.7} parent=5 // pred_check_branch
      %116 = sbr.rel (%p113) target = $region12
    $region11: #{agrnn_cell_forward.7} parent=5 // pred_region
      %s117 = ssub.s32 %s9, 1
      // Predicated region
      $region13: #{agrnn_cell_forward.7} parent=11 // pred_check
        %p118 = pneg %p56
      $region14: #{agrnn_cell_forward.7} parent=11 // pred_check_branch
        %120 = sbr.rel (%p118) target = $region16
      $region15: #{agrnn_cell_forward.7} parent=11 // pred_region
        _
      $region16: #{agrnn_cell_forward.7} parent=11 // pred_fallthru
        _
      // Predicated region
      $region17: #{agrnn_cell_forward.7} parent=11 // pred_check
        %p121 = pneg %p77
      $region18: #{agrnn_cell_forward.7} parent=11 // pred_check_branch
        %123 = sbr.rel (%p121) target = $region20
      $region19: #{agrnn_cell_forward.7} parent=11 // pred_region
        _
      $region20: #{agrnn_cell_forward.7} parent=11 // pred_fallthru
        _
    $region12: #{agrnn_cell_forward.7} parent=5 // pred_fallthru
      _
    %p124 = scmp.lt.s32.totalorder %s9, 2
    // Predicated region
    $region21: #{agrnn_cell_forward.7} parent=5 // pred_check
      %p125 = pneg %p124
    $region22: #{agrnn_cell_forward.7} parent=5 // pred_check_branch
      %127 = sbr.rel (%p125) target = $region24
    $region23: #{agrnn_cell_forward.7} parent=5 // pred_region
      // Predicated region
      $region25: #{agrnn_cell_forward.7} parent=23 // pred_check
        %p128 = pneg %p29
      $region26: #{agrnn_cell_forward.7} parent=23 // pred_check_branch
        %130 = sbr.rel (%p128) target = $region28
      $region27: #{agrnn_cell_forward.7} parent=23 // pred_region
        %s131 = smul.u32 4, %s9
        %p132 = scmp.lt.s32.totalorder %s131, 7
        %s133 = scalar_select %p132, %s131, 7
        %s134 = smul.addr %s133, 8
        %s135 = scalar_lea.vmem %s0, %s134
        %s136 = smul.u32 4, %s9
      $region28: #{agrnn_cell_forward.7} parent=23 // pred_fallthru
        _
    $region24: #{agrnn_cell_forward.7} parent=5 // pred_fallthru
      _
    %p137 = scmp.le.s32.totalorder 1, %s9
    %p138 = scmp.lt.s32.totalorder %s9, 3
    %p139 = pnand %p137, %p138
    %p140 = pneg %p139
    // Predicated region
    $region29: #{agrnn_cell_forward.7} parent=5 // pred_check
      _
    $region30: #{agrnn_cell_forward.7} parent=5 // pred_check_branch
      %142 = sbr.rel (%p139) target = $region32
    $region31: #{agrnn_cell_forward.7} parent=5 // pred_region
      %s143 = ssub.s32 %s9, 1
      %s144 = smul.u32 4, %s14
      %p145 = scmp.lt.s32.totalorder %s144, 7
      %s146 = scalar_select %p145, %s144, 7
      %s147 = smul.addr %s146, 8
      %s148 = scalar_lea.vmem %s0, %s147
      %p149 = pneg %p35
      %p150 = pneg %p32
      %p151 = pneg %p56
      %p152 = pneg %p53
      %p153 = pneg %p77
      %p154 = pneg %p74
      %p155 = pneg %p103
      %p156 = pneg %p100
      %s157 = smul.u32 4, %s14
      %p158 = scmp.lt.s32.totalorder %s157, 7
      %s159 = scalar_select %p158, %s157, 7
      %s160 = smul.addr %s159, 3
      %s161 = smul.addr %s160, 8
      %s162 = scalar_lea.vmem %s3, %s161
      %s163 = smul.u32 4, %s14
      %p164 = scmp.lt.s32.totalorder %s163, 7
      %s165 = scalar_select %p164, %s163, 7
      %s166 = smul.addr %s165, 8
      %s167 = scalar_lea.vmem %s0, %s166
      %s168 = smul.u32 4, %s14
      %s169 = smul.u32 4, %s14
      %p170 = scmp.lt.s32.totalorder %s169, 7
      %s171 = scalar_select %p170, %s169, 7
      %s172 = smul.addr %s171, 3
      %s173 = smul.addr %s172, 8
      %s174 = scalar_lea.vmem %s3, %s173
      %s175 = smul.u32 4, %s14
      %v176 = vld [vmem:[%s167] sm:$0xff]
      %v177 = vld [vmem:[%s167 + $0x8] sm:$0xff]
      %v178 = vld [vmem:[%s167 + $0x10] sm:$0xff]
      %v179 = vld [vmem:[%s167 + $0x18] sm:$0xff]
      %v180 = vld [vmem:[%s1] sm:$0xff]
      %v181 = vld [vmem:[%s1 + $0x8] sm:$0xff]
      %v182 = vld [vmem:[%s1 + $0x10] sm:$0xff]
      %v183 = vld [vmem:[%s1 + $0x18] sm:$0xff]
      %v184 = vld [vmem:[%s1 + $0x20] sm:$0xff]
      %v185 = vld [vmem:[%s1 + $0x28] sm:$0xff]
      %v186 = vld [vmem:[%s1 + $0x30] sm:$0xff]
      %v187 = vld [vmem:[%s1 + $0x38] sm:$0xff]
      %v188 = vld [vmem:[%s1 + $0x40] sm:$0xff]
      %v189 = vld [vmem:[%s1 + $0x48] sm:$0xff]
      %v190 = vld [vmem:[%s1 + $0x50] sm:$0xff]
      %v191 = vld [vmem:[%s1 + $0x58] sm:$0xff]
      %v192 = vld [vmem:[%s1 + $0x60] sm:$0xff]
      %v193 = vld [vmem:[%s1 + $0x68] sm:$0xff]
      %v194 = vld [vmem:[%s1 + $0x70] sm:$0xff]
      %v195 = vld [vmem:[%s1 + $0x78] sm:$0xff]
      %v196 = vld [vmem:[%s1 + $0x80] sm:$0xff]
      %v197 = vld [vmem:[%s1 + $0x88] sm:$0xff]
      %v198 = vld [vmem:[%s1 + $0x90] sm:$0xff]
      %v199 = vld [vmem:[%s1 + $0x98] sm:$0xff]
      %v200 = vld [vmem:[%s1 + $0xa0] sm:$0xff]
      %v201 = vld [vmem:[%s1 + $0xa8] sm:$0xff]
      %v202 = vld [vmem:[%s1 + $0xb0] sm:$0xff]
      %v203 = vld [vmem:[%s1 + $0xb8] sm:$0xff]
      %v204 = vld [vmem:[%s1 + $0xc0] sm:$0xff]
      %v205 = vld [vmem:[%s1 + $0xc8] sm:$0xff]
      %v206 = vld [vmem:[%s1 + $0xd0] sm:$0xff]
      %v207 = vld [vmem:[%s1 + $0xd8] sm:$0xff]
      %v208 = vld [vmem:[%s1 + $0xe0] sm:$0xff]
      %v209 = vld [vmem:[%s1 + $0xe8] sm:$0xff]
      %v210 = vld [vmem:[%s1 + $0xf0] sm:$0xff]
      %v211 = vld [vmem:[%s1 + $0xf8] sm:$0xff]
      %v212 = vld [vmem:[%s1 + $0x100] sm:$0xff]
      %v213 = vld [vmem:[%s1 + $0x108] sm:$0xff]
      %v214 = vld [vmem:[%s1 + $0x110] sm:$0xff]
      %v215 = vld [vmem:[%s1 + $0x118] sm:$0xff]
      %v216 = vld [vmem:[%s1 + $0x120] sm:$0xff]
      %v217 = vld [vmem:[%s1 + $0x128] sm:$0xff]
      %v218 = vld [vmem:[%s1 + $0x130] sm:$0xff]
      %v219 = vld [vmem:[%s1 + $0x138] sm:$0xff]
      %v220 = vld [vmem:[%s1 + $0x140] sm:$0xff]
      %v221 = vld [vmem:[%s1 + $0x148] sm:$0xff]
      %v222 = vld [vmem:[%s1 + $0x150] sm:$0xff]
      %v223 = vld [vmem:[%s1 + $0x158] sm:$0xff]
      %v224 = vld [vmem:[%s1 + $0x160] sm:$0xff]
      %v225 = vld [vmem:[%s1 + $0x168] sm:$0xff]
      %v226 = vld [vmem:[%s1 + $0x170] sm:$0xff]
      %v227 = vld [vmem:[%s1 + $0x178] sm:$0xff]
      %v228 = vld [vmem:[%s2] sm:$0x7]
      %v230 = vlaneseq
      %v231 = vshrl.u32 %v230, 7
      %v232 = vsub.s32 0, %v231
      %v233 = vrot.slane %v228, %v232
      %v234 = vlaneseq
      %v235 = vshrl.u32 %v234, 7
      %v236 = vsub.s32 1, %v235
      %v237 = vrot.slane %v228, %v236
      %v238 = vlaneseq
      %v239 = vshrl.u32 %v238, 7
      %v240 = vsub.s32 2, %v239
      %v241 = vrot.slane %v228, %v240
      %245 = vmatprep.subr.mxu0 %v181
      %246 = vmatpush1.msra.mxu0 %v180
      %247 = vmatprep.subr.mxu0 %v184
      %248 = vmatpush1.msra.mxu0 %v183
      %249 = vmatprep.subr.mxu0 %v187
      %250 = vmatpush1.msra.mxu0 %v186
      %251 = vmatprep.subr.mxu0 %v190
      %252 = vmatpush1.msra.mxu0 %v189
      %253 = vmatprep.subr.mxu0 %v193
      %254 = vmatpush1.msra.mxu0 %v192
      %255 = vmatprep.subr.mxu0 %v196
      %256 = vmatpush1.msra.mxu0 %v195
      %257 = vmatprep.subr.mxu0 %v199
      %258 = vmatpush1.msra.mxu0 %v198
      %259 = vmatprep.subr.mxu0 %v202
      %260 = vmatpush1.msra.mxu0 %v201
      %261 = vmatprep.subr.mxu0 %v205
      %262 = vmatpush1.msra.mxu0 %v204
      %263 = vmatprep.subr.mxu0 %v208
      %264 = vmatpush1.msra.mxu0 %v207
      %265 = vmatprep.subr.mxu0 %v211
      %266 = vmatpush1.msra.mxu0 %v210
      %267 = vmatprep.subr.mxu0 %v214
      %268 = vmatpush1.msra.mxu0 %v213
      %269 = vmatprep.subr.mxu0 %v217
      %270 = vmatpush1.msra.mxu0 %v216
      %271 = vmatprep.subr.mxu0 %v220
      %272 = vmatpush1.msra.mxu0 %v219
      %273 = vmatprep.subr.mxu0 %v223
      %274 = vmatpush1.msra.mxu0 %v222
      %275 = vmatprep.subr.mxu0 %v226
      %276 = vmatpush1.msra.mxu0 %v225
      %277 = vmatprep.subr.mxu0 0.0
      %278 = vmatpush1.msra.mxu0 0.0
      %279 = vmatprep.subr.mxu0 0.0
      %280 = vmatpush1.msra.mxu0 0.0
      %281 = vmatprep.subr.mxu0 0.0
      %282 = vmatpush1.msra.mxu0 0.0
      %283 = vmatprep.subr.mxu0 0.0
      %284 = vmatpush1.msra.mxu0 0.0
      %285 = vmatprep.subr.mxu0 0.0
      %286 = vmatpush1.msra.mxu0 0.0
      %287 = vmatprep.subr.mxu0 0.0
      %288 = vmatpush1.msra.mxu0 0.0
      %289 = vmatprep.subr.mxu0 0.0
      %290 = vmatpush1.msra.mxu0 0.0
      %291 = vmatprep.subr.mxu0 0.0
      %292 = vmatpush1.msra.mxu0 0.0
      %293 = vmatprep.subr.mxu0 0.0
      %294 = vmatpush1.msra.mxu0 0.0
      %295 = vmatprep.subr.mxu0 0.0
      %296 = vmatpush1.msra.mxu0 0.0
      %297 = vmatprep.subr.mxu0 0.0
      %298 = vmatpush1.msra.mxu0 0.0
      %299 = vmatprep.subr.mxu0 0.0
      %300 = vmatpush1.msra.mxu0 0.0
      %301 = vmatprep.subr.mxu0 0.0
      %302 = vmatpush1.msra.mxu0 0.0
      %303 = vmatprep.subr.mxu0 0.0
      %304 = vmatpush1.msra.mxu0 0.0
      %305 = vmatprep.subr.mxu0 0.0
      %306 = vmatpush1.msra.mxu0 0.0
      %307 = vmatprep.subr.mxu0 0.0
      %308 = vmatpush1.msra.mxu0 0.0
      %309 = vmatprep.mubr.f32.mxu0 0.0
      %310 = vmatmul.mubr.f32.gmra.mrb[0].mxu0 %v176
      %v311 = vpop.f32.mrb[0].mxu0
      %v312 = vadd.f32 %v233, %v311
      %v313 = vpop.f32.mrb[0].mxu0
      %v314 = vadd.f32 %v237, %v313
      %315 = vmatprep.mubr.f32.mxu0 0.0
      %316 = vmatmul.mubr.f32.gmra.mrb[0].mxu0 %v177
      %v317 = vpop.f32.mrb[0].mxu0
      %v318 = vadd.f32 %v233, %v317
      %v319 = vpop.f32.mrb[0].mxu0
      %v320 = vadd.f32 %v237, %v319
      %321 = vmatprep.mubr.f32.mxu0 0.0
      %322 = vmatmul.mubr.f32.gmra.mrb[0].mxu0 %v178
      %v323 = vpop.f32.mrb[0].mxu0
      %v324 = vadd.f32 %v233, %v323
      %v325 = vpop.f32.mrb[0].mxu0
      %v326 = vadd.f32 %v237, %v325
      %327 = vmatprep.mubr.f32.mxu0 0.0
      %328 = vmatmul.mubr.f32.gmra.mrb[0].mxu0 %v179
      %v329 = vpop.f32.mrb[0].mxu0
      %v330 = vadd.f32 %v233, %v329
      %v331 = vpop.f32.mrb[0].mxu0
      %v332 = vadd.f32 %v237, %v331
      %333 = vdwg.mxu0
      %334 = vmatprep.subr.mxu0 0.0
      %335 = vmatpush1.msra.mxu0 %v182
      %336 = vmatprep.subr.mxu0 0.0
      %337 = vmatpush1.msra.mxu0 %v185
      %338 = vmatprep.subr.mxu0 0.0
      %339 = vmatpush1.msra.mxu0 %v188
      %340 = vmatprep.subr.mxu0 0.0
      %341 = vmatpush1.msra.mxu0 %v191
      %342 = vmatprep.subr.mxu0 0.0
      %343 = vmatpush1.msra.mxu0 %v194
      %344 = vmatprep.subr.mxu0 0.0
      %345 = vmatpush1.msra.mxu0 %v197
      %346 = vmatprep.subr.mxu0 0.0
      %347 = vmatpush1.msra.mxu0 %v200
      %348 = vmatprep.subr.mxu0 0.0
      %349 = vmatpush1.msra.mxu0 %v203
      %350 = vmatprep.subr.mxu0 0.0
      %351 = vmatpush1.msra.mxu0 %v206
      %352 = vmatprep.subr.mxu0 0.0
      %353 = vmatpush1.msra.mxu0 %v209
      %354 = vmatprep.subr.mxu0 0.0
      %355 = vmatpush1.msra.mxu0 %v212
      %356 = vmatprep.subr.mxu0 0.0
      %357 = vmatpush1.msra.mxu0 %v215
      %358 = vmatprep.subr.mxu0 0.0
      %359 = vmatpush1.msra.mxu0 %v218
      %360 = vmatprep.subr.mxu0 0.0
      %361 = vmatpush1.msra.mxu0 %v221
      %362 = vmatprep.subr.mxu0 0.0
      %363 = vmatpush1.msra.mxu0 %v224
      %364 = vmatprep.subr.mxu0 0.0
      %365 = vmatpush1.msra.mxu0 %v227
      %366 = vmatprep.subr.mxu0 0.0
      %367 = vmatpush1.msra.mxu0 0.0
      %368 = vmatprep.subr.mxu0 0.0
      %369 = vmatpush1.msra.mxu0 0.0
      %370 = vmatprep.subr.mxu0 0.0
      %371 = vmatpush1.msra.mxu0 0.0
      %372 = vmatprep.subr.mxu0 0.0
      %373 = vmatpush1.msra.mxu0 0.0
      %374 = vmatprep.subr.mxu0 0.0
      %375 = vmatpush1.msra.mxu0 0.0
      %376 = vmatprep.subr.mxu0 0.0
      %377 = vmatpush1.msra.mxu0 0.0
      %378 = vmatprep.subr.mxu0 0.0
      %379 = vmatpush1.msra.mxu0 0.0
      %380 = vmatprep.subr.mxu0 0.0
      %381 = vmatpush1.msra.mxu0 0.0
      %382 = vmatprep.subr.mxu0 0.0
      %383 = vmatpush1.msra.mxu0 0.0
      %384 = vmatprep.subr.mxu0 0.0
      %385 = vmatpush1.msra.mxu0 0.0
      %386 = vmatprep.subr.mxu0 0.0
      %387 = vmatpush1.msra.mxu0 0.0
      %388 = vmatprep.subr.mxu0 0.0
      %389 = vmatpush1.msra.mxu0 0.0
      %390 = vmatprep.subr.mxu0 0.0
      %391 = vmatpush1.msra.mxu0 0.0
      %392 = vmatprep.subr.mxu0 0.0
      %393 = vmatpush1.msra.mxu0 0.0
      %394 = vmatprep.subr.mxu0 0.0
      %395 = vmatpush1.msra.mxu0 0.0
      %396 = vmatprep.subr.mxu0 0.0
      %397 = vmatpush1.msra.mxu0 0.0
      %398 = vmatprep.mubr.f32.mxu0 0.0
      %399 = vmatmul.mubr.f32.gmra.mrb[0].mxu0 %v176
      %v400 = vpop.f32.mrb[0].mxu0
      %v401 = vadd.f32 %v241, %v400
      %v402 = vpop.f32.mrb[0].mxu0
      %403 = vmatprep.mubr.f32.mxu0 0.0
      %404 = vmatmul.mubr.f32.gmra.mrb[0].mxu0 %v177
      %v405 = vpop.f32.mrb[0].mxu0
      %v406 = vadd.f32 %v241, %v405
      %v407 = vpop.f32.mrb[0].mxu0
      %408 = vmatprep.mubr.f32.mxu0 0.0
      %409 = vmatmul.mubr.f32.gmra.mrb[0].mxu0 %v178
      %v410 = vpop.f32.mrb[0].mxu0
      %v411 = vadd.f32 %v241, %v410
      %v412 = vpop.f32.mrb[0].mxu0
      %413 = vmatprep.mubr.f32.mxu0 0.0
      %414 = vmatmul.mubr.f32.gmra.mrb[0].mxu0 %v179
      %v415 = vpop.f32.mrb[0].mxu0
      %v416 = vadd.f32 %v241, %v415
      %v417 = vpop.f32.mrb[0].mxu0
      %418 = vdwg.mxu0
      %419 = vst [vmem:[%s174] sm:$0xff] %v312
      %420 = vst [vmem:[%s174 + $0x8] sm:$0xff] %v314
      %421 = vst [vmem:[%s174 + $0x10] sm:$0xff] %v401
      %422 = vst [vmem:[%s174 + $0x18] sm:$0xff] %v318
      %423 = vst [vmem:[%s174 + $0x20] sm:$0xff] %v320
      %424 = vst [vmem:[%s174 + $0x28] sm:$0xff] %v406
      %425 = vst [vmem:[%s174 + $0x30] sm:$0xff] %v324
      %426 = vst [vmem:[%s174 + $0x38] sm:$0xff] %v326
      %427 = vst [vmem:[%s174 + $0x40] sm:$0xff] %v411
      %428 = vst [vmem:[%s174 + $0x48] sm:$0xff] %v330
      %429 = vst [vmem:[%s174 + $0x50] sm:$0xff] %v332
      %430 = vst [vmem:[%s174 + $0x58] sm:$0xff] %v416
      %s431 = smul.u32 4, %s14
      %p432 = scmp.lt.s32.totalorder %s431, 7
      %s433 = scalar_select %p432, %s431, 7
      %s434 = smul.addr %s433, 3
      %s435 = smul.addr %s434, 8
      %s436 = scalar_lea.vmem %s3, %s435
      // Predicated region
      $region33: #{agrnn_cell_forward.7} parent=31 // pred_check
        %p437 = pneg %p100
      $region34: #{agrnn_cell_forward.7} parent=31 // pred_check_branch
        %439 = sbr.rel (%p437) target = $region36
      $region35: #{agrnn_cell_forward.7} parent=31 // pred_region
        %s440 = smul.u32 4, %s14
      $region36: #{agrnn_cell_forward.7} parent=31 // pred_fallthru
        _
    $region32: #{agrnn_cell_forward.7} parent=5 // pred_fallthru
      _
    %p441 = scmp.le.s32.totalorder 2, %s9
    // Predicated region
    $region37: #{agrnn_cell_forward.7} parent=5 // pred_check
      %p442 = pneg %p441
    $region38: #{agrnn_cell_forward.7} parent=5 // pred_check_branch
      %444 = sbr.rel (%p442) target = $region40
    $region39: #{agrnn_cell_forward.7} parent=5 // pred_region
      %s445 = ssub.s32 %s9, 2
      // Predicated region
      $region41: #{agrnn_cell_forward.7} parent=39 // pred_check
        %p446 = pneg %p106
      $region42: #{agrnn_cell_forward.7} parent=39 // pred_check_branch
        %448 = sbr.rel (%p446) target = $region44
      $region43: #{agrnn_cell_forward.7} parent=39 // pred_region
        %s449 = smul.u32 4, %s15
        %p450 = scmp.lt.s32.totalorder %s449, 7
        %s451 = scalar_select %p450, %s449, 7
        %s452 = smul.addr %s451, 3
        %s453 = smul.addr %s452, 8
        %s454 = scalar_lea.vmem %s3, %s453
      $region44: #{agrnn_cell_forward.7} parent=39 // pred_fallthru
        _
    $region40: #{agrnn_cell_forward.7} parent=5 // pred_fallthru
      _
  $region6: #{agrnn_cell_forward.7} parent=0 // loop_footer
    %s13 = sadd.s32 1, %s9
  $region7: #{agrnn_cell_forward.7} parent=0 // loop_footer_branch
    %8 = sbr.rel target = $region3
  $region8: #{agrnn_cell_forward.7} parent=0 // loop_exit
    _

// kernel: agrnn_cell_forward.5
$region0: #{agrnn_cell_forward.5}
  #allocation0 [shape = 'u32[]', space=smem, size = 0x4, offset = 0x4, fixed_abs, tag = 'smem constant byte address 0x4 - core index']
  #allocation1 [shape = 'u32[144,128]{1,0:T(1,128)}', space=vmem, size = 0x12000, scoped, tag = 'internal scratch']
  %s0 = inlined_call_operand.vmem [shape: f32[64,128], index: 0, kind: input, shape index: {}]
  %s1 = inlined_call_operand.vmem [shape: f32[128,128], index: 1, kind: input, shape index: {}]
  %s2 = inlined_call_operand.vmem [shape: f32[1,128], index: 2, kind: input, shape index: {}]
  %s3 = inlined_call_operand.hbm [shape: f32[128,384], index: 3, kind: input, shape index: {}]
  %s4 = inlined_call_operand.vmem [shape: f32[1,384], index: 4, kind: input, shape index: {}]
  %s5 = inlined_call_operand.vmem [shape: f32[64,384], index: 5, kind: output, shape index: {}]
  %s6 = sld [smem:[#allocation0]]
  $region57: #{agrnn_cell_forward.5} parent=0
    _
  %s8 = ssub.s32 1, %s6
  %s9 = scalar_select 0, %s8, %s6
  $region1: #{agrnn_cell_forward.5} parent=0
    #allocation2 [shape = 'u8[196608]{0}', space=vmem, size = 0x30000, scoped, tag = 'input window, operand 3, single buffered']
    #allocation3 [shape = 's32[2]{0}', space=sflag, size = 0x8, scoped, tag = 'scoped memory for agrnn_cell_forward.5']
    %10 = vsyncpa [#allocation3], 0
    loop: start=0, step=1, limit=4
    $region2: #{agrnn_cell_forward.5} parent=1 // loop_pre_header
      _
    $region3: #{agrnn_cell_forward.5} parent=1 // loop_header
      %s12 = sphi 0, %s16
      %p13 = scmp.ge.s32.totalorder %s12, 4
      %s22 = sphi 0, %s24
      %s25 = sphi 0, %s22
      %s26 = sphi 0, %s25
      %s42 = sphi 0, %s26
      %s46 = sphi 0, %s46
      %s48 = sphi 0, %s46
      %s49 = sphi 0, %s48
      %s63 = sphi 0, %s49
      %s67 = sphi 0, %s67
      %s69 = sphi 0, %s67
      %s70 = sphi 0, %s69
      %s84 = sphi 0, %s70
      %s88 = sphi 0, %s88
      %s90 = sphi 0, %s88
      %s91 = sphi 0, %s90
      %s105 = sphi 0, %s91
      %s109 = sphi 0, %s109
      %s111 = sphi 0, %s109
      %s112 = sphi 0, %s111
      %s126 = sphi 0, %s112
      %s132 = sphi 0, %s134
      %s135 = sphi 0, %s132
      %s136 = sphi 0, %s135
      %s152 = sphi 0, %s136
    $region4: #{agrnn_cell_forward.5} parent=1 // loop_header_branch
      %15 = sbr.rel (%p13) target = $region8
    $region5: #{agrnn_cell_forward.5} parent=1 // loop_body
      %s17 = ssub.s32 %s12, 1
      %s18 = ssub.s32 %s12, 2
      %s19 = sadd.s32 %s12, 1
      %s20 = ssub.s32 %s12, %s19
      %p21 = scmp.eq.s32.totalorder %s20, 0
      %s23 = sadd.s32 %s22, 1
      %s24 = scalar_select %p21, %s22, %s23
      %p27 = pneg %p21
      %p28 = scmp.eq.s32.totalorder %s12, 1
      %p29 = por %p27, %p28
      %p30 = scmp.ne.s32.totalorder %s22, %s25
      %p31 = scmp.eq.s32.totalorder %s12, 0
      %p32 = por %p30, %p31
      %p33 = scmp.ne.s32.totalorder %s22, %s25
      %p34 = scmp.eq.s32.totalorder %s17, 1
      %p35 = por %p33, %p34
      %p36 = scmp.ne.s32.totalorder %s25, %s26
      %p37 = scmp.eq.s32.totalorder %s17, 0
      %p38 = por %p36, %p37
      %p39 = scmp.ne.s32.totalorder %s25, %s26
      %p40 = scmp.eq.s32.totalorder %s18, 1
      %p41 = por %p39, %p40
      %p43 = scmp.ne.s32.totalorder %s26, %s42
      %p44 = scmp.eq.s32.totalorder %s18, 0
      %p45 = por %p43, %p44
      %s47 = sadd.s32 %s46, 1
      %p50 = scmp.eq.s32.totalorder %s12, 1
      %p51 = scmp.ne.s32.totalorder %s46, %s48
      %p52 = scmp.eq.s32.totalorder %s12, 0
      %p53 = por %p51, %p52
      %p54 = scmp.ne.s32.totalorder %s46, %s48
      %p55 = scmp.eq.s32.totalorder %s17, 1
      %p56 = por %p54, %p55
      %p57 = scmp.ne.s32.totalorder %s48, %s49
      %p58 = scmp.eq.s32.totalorder %s17, 0
      %p59 = por %p57, %p58
      %p60 = scmp.ne.s32.totalorder %s48, %s49
      %p61 = scmp.eq.s32.totalorder %s18, 1
      %p62 = por %p60, %p61
      %p64 = scmp.ne.s32.totalorder %s49, %s63
      %p65 = scmp.eq.s32.totalorder %s18, 0
      %p66 = por %p64, %p65
      %s68 = sadd.s32 %s67, 1
      %p71 = scmp.eq.s32.totalorder %s12, 1
      %p72 = scmp.ne.s32.totalorder %s67, %s69
      %p73 = scmp.eq.s32.totalorder %s12, 0
      %p74 = por %p72, %p73
      %p75 = scmp.ne.s32.totalorder %s67, %s69
      %p76 = scmp.eq.s32.totalorder %s17, 1
      %p77 = por %p75, %p76
      %p78 = scmp.ne.s32.totalorder %s69, %s70
      %p79 = scmp.eq.s32.totalorder %s17, 0
      %p80 = por %p78, %p79
      %p81 = scmp.ne.s32.totalorder %s69, %s70
      %p82 = scmp.eq.s32.totalorder %s18, 1
      %p83 = por %p81, %p82
      %p85 = scmp.ne.s32.totalorder %s70, %s84
      %p86 = scmp.eq.s32.totalorder %s18, 0
      %p87 = por %p85, %p86
      %s89 = sadd.s32 %s88, 1
      %p92 = scmp.eq.s32.totalorder %s12, 1
      %p93 = scmp.ne.s32.totalorder %s88, %s90
      %p94 = scmp.eq.s32.totalorder %s12, 0
      %p95 = por %p93, %p94
      %p96 = scmp.ne.s32.totalorder %s88, %s90
      %p97 = scmp.eq.s32.totalorder %s17, 1
      %p98 = por %p96, %p97
      %p99 = scmp.ne.s32.totalorder %s90, %s91
      %p100 = scmp.eq.s32.totalorder %s17, 0
      %p101 = por %p99, %p100
      %p102 = scmp.ne.s32.totalorder %s90, %s91
      %p103 = scmp.eq.s32.totalorder %s18, 1
      %p104 = por %p102, %p103
      %p106 = scmp.ne.s32.totalorder %s91, %s105
      %p107 = scmp.eq.s32.totalorder %s18, 0
      %p108 = por %p106, %p107
      %s110 = sadd.s32 %s109, 1
      %p113 = scmp.eq.s32.totalorder %s12, 1
      %p114 = scmp.ne.s32.totalorder %s109, %s111
      %p115 = scmp.eq.s32.totalorder %s12, 0
      %p116 = por %p114, %p115
      %p117 = scmp.ne.s32.totalorder %s109, %s111
      %p118 = scmp.eq.s32.totalorder %s17, 1
      %p119 = por %p117, %p118
      %p120 = scmp.ne.s32.totalorder %s111, %s112
      %p121 = scmp.eq.s32.totalorder %s17, 0
      %p122 = por %p120, %p121
      %p123 = scmp.ne.s32.totalorder %s111, %s112
      %p124 = scmp.eq.s32.totalorder %s18, 1
      %p125 = por %p123, %p124
      %p127 = scmp.ne.s32.totalorder %s112, %s126
      %p128 = scmp.eq.s32.totalorder %s18, 0
      %p129 = por %p127, %p128
      %s130 = ssub.s32 %s12, %s19
      %p131 = scmp.eq.s32.totalorder %s130, 0
      %s133 = sadd.s32 %s132, 1
      %s134 = scalar_select %p131, %s132, %s133
      %p137 = pneg %p131
      %p138 = scmp.eq.s32.totalorder %s12, 1
      %p139 = por %p137, %p138
      %p140 = scmp.ne.s32.totalorder %s132, %s135
      %p141 = scmp.eq.s32.totalorder %s12, 0
      %p142 = por %p140, %p141
      %p143 = scmp.ne.s32.totalorder %s132, %s135
      %p144 = scmp.eq.s32.totalorder %s17, 1
      %p145 = por %p143, %p144
      %p146 = scmp.ne.s32.totalorder %s135, %s136
      %p147 = scmp.eq.s32.totalorder %s17, 0
      %p148 = por %p146, %p147
      %p149 = scmp.ne.s32.totalorder %s135, %s136
      %p150 = scmp.eq.s32.totalorder %s18, 1
      %p151 = por %p149, %p150
      %p153 = scmp.ne.s32.totalorder %s136, %s152
      %p154 = scmp.eq.s32.totalorder %s18, 0
      %p155 = por %p153, %p154
      %p156 = scmp.le.s32.totalorder 1, %s12
      %p157 = scmp.lt.s32.totalorder %s12, 3
      %p158 = pnand %p156, %p157
      %p159 = pneg %p158
      // Predicated region
      $region9: #{agrnn_cell_forward.5} parent=5 // pred_check
        _
      $region10: #{agrnn_cell_forward.5} parent=5 // pred_check_branch
        %161 = sbr.rel (%p158) target = $region12
      $region11: #{agrnn_cell_forward.5} parent=5 // pred_region
        %s162 = ssub.s32 %s12, 1
        // Predicated region
        $region13: #{agrnn_cell_forward.5} parent=11 // pred_check
          %p163 = pneg %p59
        $region14: #{agrnn_cell_forward.5} parent=11 // pred_check_branch
          %165 = sbr.rel (%p163) target = $region16
        $region15: #{agrnn_cell_forward.5} parent=11 // pred_region
          _
        $region16: #{agrnn_cell_forward.5} parent=11 // pred_fallthru
          _
        // Predicated region
        $region17: #{agrnn_cell_forward.5} parent=11 // pred_check
          %p166 = pneg %p80
        $region18: #{agrnn_cell_forward.5} parent=11 // pred_check_branch
          %168 = sbr.rel (%p166) target = $region20
        $region19: #{agrnn_cell_forward.5} parent=11 // pred_region
          _
        $region20: #{agrnn_cell_forward.5} parent=11 // pred_fallthru
          _
        // Predicated region
        $region21: #{agrnn_cell_forward.5} parent=11 // pred_check
          %p169 = pneg %p101
        $region22: #{agrnn_cell_forward.5} parent=11 // pred_check_branch
          %171 = sbr.rel (%p169) target = $region24
        $region23: #{agrnn_cell_forward.5} parent=11 // pred_region
          %s173 = ssub.s32 6144, 6144
          %174 = vsyncadd [#allocation3], %s173
          %s175 = sshll.u32 [#allocation2], 4
          %s176 = int_to_ptr.vmem [resolvable:$true] %s175
          %181 = dma.hbm_to_vmem [thread:$0]  %s3, 6144, %s176, [#allocation3], 384, 384, 24
        $region24: #{agrnn_cell_forward.5} parent=11 // pred_fallthru
          _
        // Predicated region
        $region25: #{agrnn_cell_forward.5} parent=11 // pred_check
          %p182 = pneg %p122
        $region26: #{agrnn_cell_forward.5} parent=11 // pred_check_branch
          %184 = sbr.rel (%p182) target = $region28
        $region27: #{agrnn_cell_forward.5} parent=11 // pred_region
          _
        $region28: #{agrnn_cell_forward.5} parent=11 // pred_fallthru
          _
      $region12: #{agrnn_cell_forward.5} parent=5 // pred_fallthru
        _
      %p185 = scmp.lt.s32.totalorder %s12, 2
      // Predicated region
      $region29: #{agrnn_cell_forward.5} parent=5 // pred_check
        %p186 = pneg %p185
      $region30: #{agrnn_cell_forward.5} parent=5 // pred_check_branch
        %188 = sbr.rel (%p186) target = $region32
      $region31: #{agrnn_cell_forward.5} parent=5 // pred_region
        // Predicated region
        $region33: #{agrnn_cell_forward.5} parent=31 // pred_check
          %p189 = pneg %p32
        $region34: #{agrnn_cell_forward.5} parent=31 // pred_check_branch
          %191 = sbr.rel (%p189) target = $region36
        $region35: #{agrnn_cell_forward.5} parent=31 // pred_region
          %s192 = smul.u32 4, %s12
          %p193 = scmp.lt.s32.totalorder %s192, 7
          %s194 = scalar_select %p193, %s192, 7
          %s195 = smul.addr %s194, 8
          %s196 = scalar_lea.vmem %s0, %s195
          %s197 = smul.u32 4, %s12
        $region36: #{agrnn_cell_forward.5} parent=31 // pred_fallthru
          _
      $region32: #{agrnn_cell_forward.5} parent=5 // pred_fallthru
        _
      %p198 = scmp.le.s32.totalorder 1, %s12
      %p199 = scmp.lt.s32.totalorder %s12, 3
      %p200 = pnand %p198, %p199
      %p201 = pneg %p200
      // Predicated region
      $region37: #{agrnn_cell_forward.5} parent=5 // pred_check
        _
      $region38: #{agrnn_cell_forward.5} parent=5 // pred_check_branch
        %203 = sbr.rel (%p200) target = $region40
      $region39: #{agrnn_cell_forward.5} parent=5 // pred_region
        %s204 = ssub.s32 %s12, 1
        // Predicated region
        $region41: #{agrnn_cell_forward.5} parent=39 // pred_check
          %p205 = pneg %p101
        $region42: #{agrnn_cell_forward.5} parent=39 // pred_check_branch
          %207 = sbr.rel (%p205) target = $region44
        $region43: #{agrnn_cell_forward.5} parent=39 // pred_region
          %208 = dma.done [#allocation3], 6144
        $region44: #{agrnn_cell_forward.5} parent=39 // pred_fallthru
          _
        %s209 = smul.u32 4, %s17
        %p210 = scmp.lt.s32.totalorder %s209, 7
        %s211 = scalar_select %p210, %s209, 7
        %s212 = smul.addr %s211, 8
        %s213 = scalar_lea.vmem %s0, %s212
        %p214 = pneg %p38
        %p215 = pneg %p35
        %p216 = pneg %p59
        %p217 = pneg %p56
        %p218 = pneg %p80
        %p219 = pneg %p77
        %p220 = pneg %p101
        %p221 = pneg %p98
        %p222 = pneg %p122
        %p223 = pneg %p119
        %p224 = pneg %p148
        %p225 = pneg %p145
        %s226 = smul.u32 4, %s17
        %p227 = scmp.lt.s32.totalorder %s226, 7
        %s228 = scalar_select %p227, %s226, 7
        %s229 = smul.addr %s228, 3
        %s230 = smul.addr %s229, 8
        %s231 = scalar_lea.vmem %s5, %s230
        %s232 = smul.u32 4, %s17
        %p233 = scmp.lt.s32.totalorder %s232, 7
        %s234 = scalar_select %p233, %s232, 7
        %s235 = smul.addr %s234, 8
        %s236 = scalar_lea.vmem %s0, %s235
        %s237 = smul.u32 4, %s17
        %s238 = smul.u32 4, %s17
        %p239 = scmp.lt.s32.totalorder %s238, 7
        %s240 = scalar_select %p239, %s238, 7
        %s241 = smul.addr %s240, 3
        %s242 = smul.addr %s241, 8
        %s243 = scalar_lea.vmem %s5, %s242
        %s244 = smul.u32 4, %s17
        %v245 = vld [vmem:[%s236] sm:$0xff]
        %v246 = vld [vmem:[%s236 + $0x8] sm:$0xff]
        %v247 = vld [vmem:[%s236 + $0x10] sm:$0xff]
        %v248 = vld [vmem:[%s236 + $0x18] sm:$0xff]
        %v249 = vld [vmem:[%s1] sm:$0xff]
        %v250 = vld [vmem:[%s1 + $0x8] sm:$0xff]
        %v251 = vld [vmem:[%s1 + $0x10] sm:$0xff]
        %v252 = vld [vmem:[%s1 + $0x18] sm:$0xff]
        %v253 = vld [vmem:[%s1 + $0x20] sm:$0xff]
        %v254 = vld [vmem:[%s1 + $0x28] sm:$0xff]
        %v255 = vld [vmem:[%s1 + $0x30] sm:$0xff]
        %v256 = vld [vmem:[%s1 + $0x38] sm:$0xff]
        %v257 = vld [vmem:[%s1 + $0x40] sm:$0xff]
        %v258 = vld [vmem:[%s1 + $0x48] sm:$0xff]
        %v259 = vld [vmem:[%s1 + $0x50] sm:$0xff]
        %v260 = vld [vmem:[%s1 + $0x58] sm:$0xff]
        %v261 = vld [vmem:[%s1 + $0x60] sm:$0xff]
        %v262 = vld [vmem:[%s1 + $0x68] sm:$0xff]
        %v263 = vld [vmem:[%s1 + $0x70] sm:$0xff]
        %v264 = vld [vmem:[%s1 + $0x78] sm:$0xff]
        %v265 = vld [vmem:[%s2] sm:$0x1]
        %v267 = vlaneseq
        %v268 = vshrl.u32 %v267, 7
        %v269 = vsub.s32 0, %v268
        %v270 = vrot.slane %v265, %v269
        %272 = vmatprep.subr.mxu0 0.0
        %273 = vmatpush1.msra.mxu0 %v249
        %274 = vmatprep.subr.mxu0 0.0
        %275 = vmatpush1.msra.mxu0 %v250
        %276 = vmatprep.subr.mxu0 0.0
        %277 = vmatpush1.msra.mxu0 %v251
        %278 = vmatprep.subr.mxu0 0.0
        %279 = vmatpush1.msra.mxu0 %v252
        %280 = vmatprep.subr.mxu0 0.0
        %281 = vmatpush1.msra.mxu0 %v253
        %282 = vmatprep.subr.mxu0 0.0
        %283 = vmatpush1.msra.mxu0 %v254
        %284 = vmatprep.subr.mxu0 0.0
        %285 = vmatpush1.msra.mxu0 %v255
        %286 = vmatprep.subr.mxu0 0.0
        %287 = vmatpush1.msra.mxu0 %v256
        %288 = vmatprep.subr.mxu0 0.0
        %289 = vmatpush1.msra.mxu0 %v257
        %290 = vmatprep.subr.mxu0 0.0
        %291 = vmatpush1.msra.mxu0 %v258
        %292 = vmatprep.subr.mxu0 0.0
        %293 = vmatpush1.msra.mxu0 %v259
        %294 = vmatprep.subr.mxu0 0.0
        %295 = vmatpush1.msra.mxu0 %v260
        %296 = vmatprep.subr.mxu0 0.0
        %297 = vmatpush1.msra.mxu0 %v261
        %298 = vmatprep.subr.mxu0 0.0
        %299 = vmatpush1.msra.mxu0 %v262
        %300 = vmatprep.subr.mxu0 0.0
        %301 = vmatpush1.msra.mxu0 %v263
        %302 = vmatprep.subr.mxu0 0.0
        %303 = vmatpush1.msra.mxu0 %v264
        %304 = vmatprep.subr.mxu0 0.0
        %305 = vmatpush1.msra.mxu0 0.0
        %306 = vmatprep.subr.mxu0 0.0
        %307 = vmatpush1.msra.mxu0 0.0
        %308 = vmatprep.subr.mxu0 0.0
        %309 = vmatpush1.msra.mxu0 0.0
        %310 = vmatprep.subr.mxu0 0.0
        %311 = vmatpush1.msra.mxu0 0.0
        %312 = vmatprep.subr.mxu0 0.0
        %313 = vmatpush1.msra.mxu0 0.0
        %314 = vmatprep.subr.mxu0 0.0
        %315 = vmatpush1.msra.mxu0 0.0
        %316 = vmatprep.subr.mxu0 0.0
        %317 = vmatpush1.msra.mxu0 0.0
        %318 = vmatprep.subr.mxu0 0.0
        %319 = vmatpush1.msra.mxu0 0.0
        %320 = vmatprep.subr.mxu0 0.0
        %321 = vmatpush1.msra.mxu0 0.0
        %322 = vmatprep.subr.mxu0 0.0
        %323 = vmatpush1.msra.mxu0 0.0
        %324 = vmatprep.subr.mxu0 0.0
        %325 = vmatpush1.msra.mxu0 0.0
        %326 = vmatprep.subr.mxu0 0.0
        %327 = vmatpush1.msra.mxu0 0.0
        %328 = vmatprep.subr.mxu0 0.0
        %329 = vmatpush1.msra.mxu0 0.0
        %330 = vmatprep.subr.mxu0 0.0
        %331 = vmatpush1.msra.mxu0 0.0
        %332 = vmatprep.subr.mxu0 0.0
        %333 = vmatpush1.msra.mxu0 0.0
        %334 = vmatprep.subr.mxu0 0.0
        %335 = vmatpush1.msra.mxu0 0.0
        %336 = vmatprep.mubr.f32.mxu0 0.0
        %337 = vmatmul.mubr.f32.gmra.mrb[0].mxu0 %v245
        %v338 = vpop.f32.mrb[0].mxu0
        %v339 = vadd.f32 %v270, %v338
        %v340 = vpop.f32.mrb[0].mxu0
        %341 = vmatprep.mubr.f32.mxu0 0.0
        %342 = vmatmul.mubr.f32.gmra.mrb[0].mxu0 %v246
        %v343 = vpop.f32.mrb[0].mxu0
        %v344 = vadd.f32 %v270, %v343
        %v345 = vpop.f32.mrb[0].mxu0
        %346 = vmatprep.mubr.f32.mxu0 0.0
        %347 = vmatmul.mubr.f32.gmra.mrb[0].mxu0 %v247
        %v348 = vpop.f32.mrb[0].mxu0
        %v349 = vadd.f32 %v270, %v348
        %v350 = vpop.f32.mrb[0].mxu0
        %351 = vmatprep.mubr.f32.mxu0 0.0
        %352 = vmatmul.mubr.f32.gmra.mrb[0].mxu0 %v248
        %v353 = vpop.f32.mrb[0].mxu0
        %v354 = vadd.f32 %v270, %v353
        %v355 = vpop.f32.mrb[0].mxu0
        %356 = vdwg.mxu0
        %v357 = vmax.f32 %v339, 0.0
        %v358 = vmax.f32 %v344, 0.0
        %v359 = vmax.f32 %v349, 0.0
        %v360 = vmax.f32 %v354, 0.0
        %v361 = vld [vmem:[#allocation2] sm:$0xff]
        %v362 = vld [vmem:[#allocation2 + $0x8] sm:$0xff]
        %v363 = vld [vmem:[#allocation2 + $0x10] sm:$0xff]
        %v364 = vld [vmem:[#allocation2 + $0x18] sm:$0xff]
        %v365 = vld [vmem:[#allocation2 + $0x20] sm:$0xff]
        %v366 = vld [vmem:[#allocation2 + $0x28] sm:$0xff]
        %v367 = vld [vmem:[#allocation2 + $0x30] sm:$0xff]
        %v368 = vld [vmem:[#allocation2 + $0x38] sm:$0xff]
        %v369 = vld [vmem:[#allocation2 + $0x40] sm:$0xff]
        %v370 = vld [vmem:[#allocation2 + $0x48] sm:$0xff]
        %v371 = vld [vmem:[#allocation2 + $0x50] sm:$0xff]
        %v372 = vld [vmem:[#allocation2 + $0x58] sm:$0xff]
        %v373 = vld [vmem:[#allocation2 + $0x60] sm:$0xff]
        %v374 = vld [vmem:[#allocation2 + $0x68] sm:$0xff]
        %v375 = vld [vmem:[#allocation2 + $0x70] sm:$0xff]
        %v376 = vld [vmem:[#allocation2 + $0x78] sm:$0xff]
        %v377 = vld [vmem:[#allocation2 + $0x80] sm:$0xff]
        %v378 = vld [vmem:[#allocation2 + $0x88] sm:$0xff]
        %v379 = vld [vmem:[#allocation2 + $0x90] sm:$0xff]
        %v380 = vld [vmem:[#allocation2 + $0x98] sm:$0xff]
        %v381 = vld [vmem:[#allocation2 + $0xa0] sm:$0xff]
        %v382 = vld [vmem:[#allocation2 + $0xa8] sm:$0xff]
        %v383 = vld [vmem:[#allocation2 + $0xb0] sm:$0xff]
        %v384 = vld [vmem:[#allocation2 + $0xb8] sm:$0xff]
        %v385 = vld [vmem:[#allocation2 + $0xc0] sm:$0xff]
        %v386 = vld [vmem:[#allocation2 + $0xc8] sm:$0xff]
        %v387 = vld [vmem:[#allocation2 + $0xd0] sm:$0xff]
        %v388 = vld [vmem:[#allocation2 + $0xd8] sm:$0xff]
        %v389 = vld [vmem:[#allocation2 + $0xe0] sm:$0xff]
        %v390 = vld [vmem:[#allocation2 + $0xe8] sm:$0xff]
        %v391 = vld [vmem:[#allocation2 + $0xf0] sm:$0xff]
        %v392 = vld [vmem:[#allocation2 + $0xf8] sm:$0xff]
        %v393 = vld [vmem:[#allocation2 + $0x100] sm:$0xff]
        %v394 = vld [vmem:[#allocation2 + $0x108] sm:$0xff]
        %v395 = vld [vmem:[#allocation2 + $0x110] sm:$0xff]
        %v396 = vld [vmem:[#allocation2 + $0x118] sm:$0xff]
        %v397 = vld [vmem:[#allocation2 + $0x120] sm:$0xff]
        %v398 = vld [vmem:[#allocation2 + $0x128] sm:$0xff]
        %v399 = vld [vmem:[#allocation2 + $0x130] sm:$0xff]
        %v400 = vld [vmem:[#allocation2 + $0x138] sm:$0xff]
        %v401 = vld [vmem:[#allocation2 + $0x140] sm:$0xff]
        %v402 = vld [vmem:[#allocation2 + $0x148] sm:$0xff]
        %v403 = vld [vmem:[#allocation2 + $0x150] sm:$0xff]
        %v404 = vld [vmem:[#allocation2 + $0x158] sm:$0xff]
        %v405 = vld [vmem:[#allocation2 + $0x160] sm:$0xff]
        %v406 = vld [vmem:[#allocation2 + $0x168] sm:$0xff]
        %v407 = vld [vmem:[#allocation2 + $0x170] sm:$0xff]
        %v408 = vld [vmem:[#allocation2 + $0x178] sm:$0xff]
        %v409 = vld [vmem:[%s4] sm:$0x7]
        %v411 = vlaneseq
        %v412 = vshrl.u32 %v411, 7
        %v413 = vsub.s32 0, %v412
        %v414 = vrot.slane %v409, %v413
        %v415 = vlaneseq
        %v416 = vshrl.u32 %v415, 7
        %v417 = vsub.s32 1, %v416
        %v418 = vrot.slane %v409, %v417
        %v419 = vlaneseq
        %v420 = vshrl.u32 %v419, 7
        %v421 = vsub.s32 2, %v420
        %v422 = vrot.slane %v409, %v421
        %426 = vmatprep.subr.mxu0 %v362
        %427 = vmatpush1.msra.mxu0 %v361
        %428 = vmatprep.subr.mxu0 %v365
        %429 = vmatpush1.msra.mxu0 %v364
        %430 = vmatprep.subr.mxu0 %v368
        %431 = vmatpush1.msra.mxu0 %v367
        %432 = vmatprep.subr.mxu0 %v371
        %433 = vmatpush1.msra.mxu0 %v370
        %434 = vmatprep.subr.mxu0 %v374
        %435 = vmatpush1.msra.mxu0 %v373
        %436 = vmatprep.subr.mxu0 %v377
        %437 = vmatpush1.msra.mxu0 %v376
        %438 = vmatprep.subr.mxu0 %v380
        %439 = vmatpush1.msra.mxu0 %v379
        %440 = vmatprep.subr.mxu0 %v383
        %441 = vmatpush1.msra.mxu0 %v382
        %442 = vmatprep.subr.mxu0 %v386
        %443 = vmatpush1.msra.mxu0 %v385
        %444 = vmatprep.subr.mxu0 %v389
        %445 = vmatpush1.msra.mxu0 %v388
        %446 = vmatprep.subr.mxu0 %v392
        %447 = vmatpush1.msra.mxu0 %v391
        %448 = vmatprep.subr.mxu0 %v395
        %449 = vmatpush1.msra.mxu0 %v394
        %450 = vmatprep.subr.mxu0 %v398
        %451 = vmatpush1.msra.mxu0 %v397
        %452 = vmatprep.subr.mxu0 %v401
        %453 = vmatpush1.msra.mxu0 %v400
        %454 = vmatprep.subr.mxu0 %v404
        %455 = vmatpush1.msra.mxu0 %v403
        %456 = vmatprep.subr.mxu0 %v407
        %457 = vmatpush1.msra.mxu0 %v406
        %458 = vmatprep.subr.mxu0 0.0
        %459 = vmatpush1.msra.mxu0 0.0
        %460 = vmatprep.subr.mxu0 0.0
        %461 = vmatpush1.msra.mxu0 0.0
        %462 = vmatprep.subr.mxu0 0.0
        %463 = vmatpush1.msra.mxu0 0.0
        %464 = vmatprep.subr.mxu0 0.0
        %465 = vmatpush1.msra.mxu0 0.0
        %466 = vmatprep.subr.mxu0 0.0
        %467 = vmatpush1.msra.mxu0 0.0
        %468 = vmatprep.subr.mxu0 0.0
        %469 = vmatpush1.msra.mxu0 0.0
        %470 = vmatprep.subr.mxu0 0.0
        %471 = vmatpush1.msra.mxu0 0.0
        %472 = vmatprep.subr.mxu0 0.0
        %473 = vmatpush1.msra.mxu0 0.0
        %474 = vmatprep.subr.mxu0 0.0
        %475 = vmatpush1.msra.mxu0 0.0
        %476 = vmatprep.subr.mxu0 0.0
        %477 = vmatpush1.msra.mxu0 0.0
        %478 = vmatprep.subr.mxu0 0.0
        %479 = vmatpush1.msra.mxu0 0.0
        %480 = vmatprep.subr.mxu0 0.0
        %481 = vmatpush1.msra.mxu0 0.0
        %482 = vmatprep.subr.mxu0 0.0
        %483 = vmatpush1.msra.mxu0 0.0
        %484 = vmatprep.subr.mxu0 0.0
        %485 = vmatpush1.msra.mxu0 0.0
        %486 = vmatprep.subr.mxu0 0.0
        %487 = vmatpush1.msra.mxu0 0.0
        %488 = vmatprep.subr.mxu0 0.0
        %489 = vmatpush1.msra.mxu0 0.0
        %490 = vmatprep.mubr.f32.mxu0 0.0
        %491 = vmatmul.mubr.f32.gmra.mrb[0].mxu0 %v357
        %v492 = vpop.f32.mrb[0].mxu0
        %v493 = vadd.f32 %v414, %v492
        %v494 = vpop.f32.mrb[0].mxu0
        %v495 = vadd.f32 %v418, %v494
        %496 = vmatprep.mubr.f32.mxu0 0.0
        %497 = vmatmul.mubr.f32.gmra.mrb[0].mxu0 %v358
        %v498 = vpop.f32.mrb[0].mxu0
        %v499 = vadd.f32 %v414, %v498
        %v500 = vpop.f32.mrb[0].mxu0
        %v501 = vadd.f32 %v418, %v500
        %502 = vmatprep.mubr.f32.mxu0 0.0
        %503 = vmatmul.mubr.f32.gmra.mrb[0].mxu0 %v359
        %v504 = vpop.f32.mrb[0].mxu0
        %v505 = vadd.f32 %v414, %v504
        %v506 = vpop.f32.mrb[0].mxu0
        %v507 = vadd.f32 %v418, %v506
        %508 = vmatprep.mubr.f32.mxu0 0.0
        %509 = vmatmul.mubr.f32.gmra.mrb[0].mxu0 %v360
        %v510 = vpop.f32.mrb[0].mxu0
        %v511 = vadd.f32 %v414, %v510
        %v512 = vpop.f32.mrb[0].mxu0
        %v513 = vadd.f32 %v418, %v512
        %514 = vdwg.mxu0
        %515 = vmatprep.subr.mxu0 0.0
        %516 = vmatpush1.msra.mxu0 %v363
        %517 = vmatprep.subr.mxu0 0.0
        %518 = vmatpush1.msra.mxu0 %v366
        %519 = vmatprep.subr.mxu0 0.0
        %520 = vmatpush1.msra.mxu0 %v369
        %521 = vmatprep.subr.mxu0 0.0
        %522 = vmatpush1.msra.mxu0 %v372
        %523 = vmatprep.subr.mxu0 0.0
        %524 = vmatpush1.msra.mxu0 %v375
        %525 = vmatprep.subr.mxu0 0.0
        %526 = vmatpush1.msra.mxu0 %v378
        %527 = vmatprep.subr.mxu0 0.0
        %528 = vmatpush1.msra.mxu0 %v381
        %529 = vmatprep.subr.mxu0 0.0
        %530 = vmatpush1.msra.mxu0 %v384
        %531 = vmatprep.subr.mxu0 0.0
        %532 = vmatpush1.msra.mxu0 %v387
        %533 = vmatprep.subr.mxu0 0.0
        %534 = vmatpush1.msra.mxu0 %v390
        %535 = vmatprep.subr.mxu0 0.0
        %536 = vmatpush1.msra.mxu0 %v393
        %537 = vmatprep.subr.mxu0 0.0
        %538 = vmatpush1.msra.mxu0 %v396
        %539 = vmatprep.subr.mxu0 0.0
        %540 = vmatpush1.msra.mxu0 %v399
        %541 = vmatprep.subr.mxu0 0.0
        %542 = vmatpush1.msra.mxu0 %v402
        %543 = vmatprep.subr.mxu0 0.0
        %544 = vmatpush1.msra.mxu0 %v405
        %545 = vmatprep.subr.mxu0 0.0
        %546 = vmatpush1.msra.mxu0 %v408
        %547 = vmatprep.subr.mxu0 0.0
        %548 = vmatpush1.msra.mxu0 0.0
        %549 = vmatprep.subr.mxu0 0.0
        %550 = vmatpush1.msra.mxu0 0.0
        %551 = vmatprep.subr.mxu0 0.0
        %552 = vmatpush1.msra.mxu0 0.0
        %553 = vmatprep.subr.mxu0 0.0
        %554 = vmatpush1.msra.mxu0 0.0
        %555 = vmatprep.subr.mxu0 0.0
        %556 = vmatpush1.msra.mxu0 0.0
        %557 = vmatprep.subr.mxu0 0.0
        %558 = vmatpush1.msra.mxu0 0.0
        %559 = vmatprep.subr.mxu0 0.0
        %560 = vmatpush1.msra.mxu0 0.0
        %561 = vmatprep.subr.mxu0 0.0
        %562 = vmatpush1.msra.mxu0 0.0
        %563 = vmatprep.subr.mxu0 0.0
        %564 = vmatpush1.msra.mxu0 0.0
        %565 = vmatprep.subr.mxu0 0.0
        %566 = vmatpush1.msra.mxu0 0.0
        %567 = vmatprep.subr.mxu0 0.0
        %568 = vmatpush1.msra.mxu0 0.0
        %569 = vmatprep.subr.mxu0 0.0
        %570 = vmatpush1.msra.mxu0 0.0
        %571 = vmatprep.subr.mxu0 0.0
        %572 = vmatpush1.msra.mxu0 0.0
        %573 = vmatprep.subr.mxu0 0.0
        %574 = vmatpush1.msra.mxu0 0.0
        %575 = vmatprep.subr.mxu0 0.0
        %576 = vmatpush1.msra.mxu0 0.0
        %577 = vmatprep.subr.mxu0 0.0
        %578 = vmatpush1.msra.mxu0 0.0
        %579 = vmatprep.mubr.f32.mxu0 0.0
        %580 = vmatmul.mubr.f32.gmra.mrb[0].mxu0 %v357
        %v581 = vpop.f32.mrb[0].mxu0
        %v582 = vadd.f32 %v422, %v581
        %v583 = vpop.f32.mrb[0].mxu0
        %584 = vmatprep.mubr.f32.mxu0 0.0
        %585 = vmatmul.mubr.f32.gmra.mrb[0].mxu0 %v358
        %v586 = vpop.f32.mrb[0].mxu0
        %v587 = vadd.f32 %v422, %v586
        %v588 = vpop.f32.mrb[0].mxu0
        %589 = vmatprep.mubr.f32.mxu0 0.0
        %590 = vmatmul.mubr.f32.gmra.mrb[0].mxu0 %v359
        %v591 = vpop.f32.mrb[0].mxu0
        %v592 = vadd.f32 %v422, %v591
        %v593 = vpop.f32.mrb[0].mxu0
        %594 = vmatprep.mubr.f32.mxu0 0.0
        %595 = vmatmul.mubr.f32.gmra.mrb[0].mxu0 %v360
        %v596 = vpop.f32.mrb[0].mxu0
        %v597 = vadd.f32 %v422, %v596
        %v598 = vpop.f32.mrb[0].mxu0
        %599 = vdwg.mxu0
        %600 = vst [vmem:[%s243] sm:$0xff] %v493
        %601 = vst [vmem:[%s243 + $0x8] sm:$0xff] %v495
        %602 = vst [vmem:[%s243 + $0x10] sm:$0xff] %v582
        %603 = vst [vmem:[%s243 + $0x18] sm:$0xff] %v499
        %604 = vst [vmem:[%s243 + $0x20] sm:$0xff] %v501
        %605 = vst [vmem:[%s243 + $0x28] sm:$0xff] %v587
        %606 = vst [vmem:[%s243 + $0x30] sm:$0xff] %v505
        %607 = vst [vmem:[%s243 + $0x38] sm:$0xff] %v507
        %608 = vst [vmem:[%s243 + $0x40] sm:$0xff] %v592
        %609 = vst [vmem:[%s243 + $0x48] sm:$0xff] %v511
        %610 = vst [vmem:[%s243 + $0x50] sm:$0xff] %v513
        %611 = vst [vmem:[%s243 + $0x58] sm:$0xff] %v597
        %s612 = smul.u32 4, %s17
        %p613 = scmp.lt.s32.totalorder %s612, 7
        %s614 = scalar_select %p613, %s612, 7
        %s615 = smul.addr %s614, 3
        %s616 = smul.addr %s615, 8
        %s617 = scalar_lea.vmem %s5, %s616
        // Predicated region
        $region45: #{agrnn_cell_forward.5} parent=39 // pred_check
          %p618 = pneg %p145
        $region46: #{agrnn_cell_forward.5} parent=39 // pred_check_branch
          %620 = sbr.rel (%p618) target = $region48
        $region47: #{agrnn_cell_forward.5} parent=39 // pred_region
          %s621 = smul.u32 4, %s17
        $region48: #{agrnn_cell_forward.5} parent=39 // pred_fallthru
          _
      $region40: #{agrnn_cell_forward.5} parent=5 // pred_fallthru
        _
      %p622 = scmp.le.s32.totalorder 2, %s12
      // Predicated region
      $region49: #{agrnn_cell_forward.5} parent=5 // pred_check
        %p623 = pneg %p622
      $region50: #{agrnn_cell_forward.5} parent=5 // pred_check_branch
        %625 = sbr.rel (%p623) target = $region52
      $region51: #{agrnn_cell_forward.5} parent=5 // pred_region
        %s626 = ssub.s32 %s12, 2
        // Predicated region
        $region53: #{agrnn_cell_forward.5} parent=51 // pred_check
          %p627 = pneg %p151
        $region54: #{agrnn_cell_forward.5} parent=51 // pred_check_branch
          %629 = sbr.rel (%p627) target = $region56
        $region55: #{agrnn_cell_forward.5} parent=51 // pred_region
          %s630 = smul.u32 4, %s18
          %p631 = scmp.lt.s32.totalorder %s630, 7
          %s632 = scalar_select %p631, %s630, 7
          %s633 = smul.addr %s632, 3
          %s634 = smul.addr %s633, 8
          %s635 = scalar_lea.vmem %s5, %s634
        $region56: #{agrnn_cell_forward.5} parent=51 // pred_fallthru
          _
      $region52: #{agrnn_cell_forward.5} parent=5 // pred_fallthru
        _
    $region6: #{agrnn_cell_forward.5} parent=1 // loop_footer
      %s16 = sadd.s32 1, %s12
    $region7: #{agrnn_cell_forward.5} parent=1 // loop_footer_branch
      %11 = sbr.rel target = $region3
    $region8: #{agrnn_cell_forward.5} parent=1 // loop_exit
      _
    %636 = vsyncpa [#allocation3], 1
    %s637 = scalar_lea.sflag [#allocation3], 1
    %638 = vsyncpa %s637, 1

// kernel: agrnn_cell_forward.6
$region0: #{agrnn_cell_forward.6}
  #allocation0 [shape = 'u32[]', space=smem, size = 0x4, offset = 0x4, fixed_abs, tag = 'smem constant byte address 0x4 - core index']
  #allocation1 [shape = 'u32[144,128]{1,0:T(1,128)}', space=vmem, size = 0x12000, scoped, tag = 'internal scratch']
  #allocation2 [shape = 'f32[8,128]{1,0:T(8,128)}', space=vmem, size = 0x1000, scoped, tag = 'scratch operand']
  %s0 = inlined_call_operand.vmem [shape: f32[8,8,384], index: 0, kind: input, shape index: {}]
  %s1 = inlined_call_operand.vmem [shape: f32[8,128], index: 1, kind: input, shape index: {}]
  %s2 = inlined_call_operand.vmem [shape: f32[128,384], index: 2, kind: input, shape index: {}]
  %s3 = inlined_call_operand.vmem [shape: f32[1,384], index: 3, kind: input, shape index: {}]
  %s4 = inlined_call_operand.vmem [shape: f32[8,8,128], index: 4, kind: output, shape index: {}]
  %s5 = sld [smem:[#allocation0]]
  $region53: #{agrnn_cell_forward.6} parent=0
    _
  %s7 = ssub.s32 1, %s5
  %s8 = scalar_select 0, %s7, %s5
  loop: start=0, step=1, limit=10
  $region2: #{agrnn_cell_forward.6} parent=0 // loop_pre_header
    _
  $region3: #{agrnn_cell_forward.6} parent=0 // loop_header
    %s10 = sphi 0, %s14
    %p11 = scmp.ge.s32.totalorder %s10, 10
    %s20 = sphi 0, %s22
    %s23 = sphi 0, %s20
    %s24 = sphi 0, %s23
    %s40 = sphi 0, %s24
    %s44 = sphi 0, %s44
    %s46 = sphi 0, %s44
    %s47 = sphi 0, %s46
    %s61 = sphi 0, %s47
    %s65 = sphi 0, %s65
    %s67 = sphi 0, %s65
    %s68 = sphi 0, %s67
    %s82 = sphi 0, %s68
    %s86 = sphi 0, %s86
    %s88 = sphi 0, %s86
    %s89 = sphi 0, %s88
    %s103 = sphi 0, %s89
    %s109 = sphi 0, %s111
    %s112 = sphi 0, %s109
    %s113 = sphi 0, %s112
    %s129 = sphi 0, %s113
  $region4: #{agrnn_cell_forward.6} parent=0 // loop_header_branch
    %13 = sbr.rel (%p11) target = $region8
  $region5: #{agrnn_cell_forward.6} parent=0 // loop_body
    %s15 = ssub.s32 %s10, 1
    %s16 = ssub.s32 %s10, 2
    %s17 = sadd.s32 %s10, 1
    %s18 = ssub.s32 %s10, %s17
    %p19 = scmp.eq.s32.totalorder %s18, 0
    %s21 = sadd.s32 %s20, 1
    %s22 = scalar_select %p19, %s20, %s21
    %p25 = pneg %p19
    %p26 = scmp.eq.s32.totalorder %s10, 7
    %p27 = por %p25, %p26
    %p28 = scmp.ne.s32.totalorder %s20, %s23
    %p29 = scmp.eq.s32.totalorder %s10, 0
    %p30 = por %p28, %p29
    %p31 = scmp.ne.s32.totalorder %s20, %s23
    %p32 = scmp.eq.s32.totalorder %s15, 7
    %p33 = por %p31, %p32
    %p34 = scmp.ne.s32.totalorder %s23, %s24
    %p35 = scmp.eq.s32.totalorder %s15, 0
    %p36 = por %p34, %p35
    %p37 = scmp.ne.s32.totalorder %s23, %s24
    %p38 = scmp.eq.s32.totalorder %s16, 7
    %p39 = por %p37, %p38
    %p41 = scmp.ne.s32.totalorder %s24, %s40
    %p42 = scmp.eq.s32.totalorder %s16, 0
    %p43 = por %p41, %p42
    %s45 = sadd.s32 %s44, 1
    %p48 = scmp.eq.s32.totalorder %s10, 7
    %p49 = scmp.ne.s32.totalorder %s44, %s46
    %p50 = scmp.eq.s32.totalorder %s10, 0
    %p51 = por %p49, %p50
    %p52 = scmp.ne.s32.totalorder %s44, %s46
    %p53 = scmp.eq.s32.totalorder %s15, 7
    %p54 = por %p52, %p53
    %p55 = scmp.ne.s32.totalorder %s46, %s47
    %p56 = scmp.eq.s32.totalorder %s15, 0
    %p57 = por %p55, %p56
    %p58 = scmp.ne.s32.totalorder %s46, %s47
    %p59 = scmp.eq.s32.totalorder %s16, 7
    %p60 = por %p58, %p59
    %p62 = scmp.ne.s32.totalorder %s47, %s61
    %p63 = scmp.eq.s32.totalorder %s16, 0
    %p64 = por %p62, %p63
    %s66 = sadd.s32 %s65, 1
    %p69 = scmp.eq.s32.totalorder %s10, 7
    %p70 = scmp.ne.s32.totalorder %s65, %s67
    %p71 = scmp.eq.s32.totalorder %s10, 0
    %p72 = por %p70, %p71
    %p73 = scmp.ne.s32.totalorder %s65, %s67
    %p74 = scmp.eq.s32.totalorder %s15, 7
    %p75 = por %p73, %p74
    %p76 = scmp.ne.s32.totalorder %s67, %s68
    %p77 = scmp.eq.s32.totalorder %s15, 0
    %p78 = por %p76, %p77
    %p79 = scmp.ne.s32.totalorder %s67, %s68
    %p80 = scmp.eq.s32.totalorder %s16, 7
    %p81 = por %p79, %p80
    %p83 = scmp.ne.s32.totalorder %s68, %s82
    %p84 = scmp.eq.s32.totalorder %s16, 0
    %p85 = por %p83, %p84
    %s87 = sadd.s32 %s86, 1
    %p90 = scmp.eq.s32.totalorder %s10, 7
    %p91 = scmp.ne.s32.totalorder %s86, %s88
    %p92 = scmp.eq.s32.totalorder %s10, 0
    %p93 = por %p91, %p92
    %p94 = scmp.ne.s32.totalorder %s86, %s88
    %p95 = scmp.eq.s32.totalorder %s15, 7
    %p96 = por %p94, %p95
    %p97 = scmp.ne.s32.totalorder %s88, %s89
    %p98 = scmp.eq.s32.totalorder %s15, 0
    %p99 = por %p97, %p98
    %p100 = scmp.ne.s32.totalorder %s88, %s89
    %p101 = scmp.eq.s32.totalorder %s16, 7
    %p102 = por %p100, %p101
    %p104 = scmp.ne.s32.totalorder %s89, %s103
    %p105 = scmp.eq.s32.totalorder %s16, 0
    %p106 = por %p104, %p105
    %s107 = ssub.s32 %s10, %s17
    %p108 = scmp.eq.s32.totalorder %s107, 0
    %s110 = sadd.s32 %s109, 1
    %s111 = scalar_select %p108, %s109, %s110
    %p114 = pneg %p108
    %p115 = scmp.eq.s32.totalorder %s10, 7
    %p116 = por %p114, %p115
    %p117 = scmp.ne.s32.totalorder %s109, %s112
    %p118 = scmp.eq.s32.totalorder %s10, 0
    %p119 = por %p117, %p118
    %p120 = scmp.ne.s32.totalorder %s109, %s112
    %p121 = scmp.eq.s32.totalorder %s15, 7
    %p122 = por %p120, %p121
    %p123 = scmp.ne.s32.totalorder %s112, %s113
    %p124 = scmp.eq.s32.totalorder %s15, 0
    %p125 = por %p123, %p124
    %p126 = scmp.ne.s32.totalorder %s112, %s113
    %p127 = scmp.eq.s32.totalorder %s16, 7
    %p128 = por %p126, %p127
    %p130 = scmp.ne.s32.totalorder %s113, %s129
    %p131 = scmp.eq.s32.totalorder %s16, 0
    %p132 = por %p130, %p131
    %p133 = scmp.le.s32.totalorder 1, %s10
    %p134 = scmp.lt.s32.totalorder %s10, 9
    %p135 = pnand %p133, %p134
    %p136 = pneg %p135
    // Predicated region
    $region9: #{agrnn_cell_forward.6} parent=5 // pred_check
      _
    $region10: #{agrnn_cell_forward.6} parent=5 // pred_check_branch
      %138 = sbr.rel (%p135) target = $region12
    $region11: #{agrnn_cell_forward.6} parent=5 // pred_region
      %s139 = ssub.s32 %s10, 1
      // Predicated region
      $region13: #{agrnn_cell_forward.6} parent=11 // pred_check
        %p140 = pneg %p57
      $region14: #{agrnn_cell_forward.6} parent=11 // pred_check_branch
        %142 = sbr.rel (%p140) target = $region16
      $region15: #{agrnn_cell_forward.6} parent=11 // pred_region
        _
      $region16: #{agrnn_cell_forward.6} parent=11 // pred_fallthru
        _
      // Predicated region
      $region17: #{agrnn_cell_forward.6} parent=11 // pred_check
        %p143 = pneg %p78
      $region18: #{agrnn_cell_forward.6} parent=11 // pred_check_branch
        %145 = sbr.rel (%p143) target = $region20
      $region19: #{agrnn_cell_forward.6} parent=11 // pred_region
        _
      $region20: #{agrnn_cell_forward.6} parent=11 // pred_fallthru
        _
      // Predicated region
      $region21: #{agrnn_cell_forward.6} parent=11 // pred_check
        %p146 = pneg %p99
      $region22: #{agrnn_cell_forward.6} parent=11 // pred_check_branch
        %148 = sbr.rel (%p146) target = $region24
      $region23: #{agrnn_cell_forward.6} parent=11 // pred_region
        _
      $region24: #{agrnn_cell_forward.6} parent=11 // pred_fallthru
        _
    $region12: #{agrnn_cell_forward.6} parent=5 // pred_fallthru
      _
    %p149 = scmp.lt.s32.totalorder %s10, 8
    // Predicated region
    $region25: #{agrnn_cell_forward.6} parent=5 // pred_check
      %p150 = pneg %p149
    $region26: #{agrnn_cell_forward.6} parent=5 // pred_check_branch
      %152 = sbr.rel (%p150) target = $region28
    $region27: #{agrnn_cell_forward.6} parent=5 // pred_region
      // Predicated region
      $region29: #{agrnn_cell_forward.6} parent=27 // pred_check
        %p153 = pneg %p30
      $region30: #{agrnn_cell_forward.6} parent=27 // pred_check_branch
        %155 = sbr.rel (%p153) target = $region32
      $region31: #{agrnn_cell_forward.6} parent=27 // pred_region
        %p156 = scmp.lt.s32.totalorder %s10, 7
        %s157 = scalar_select %p156, %s10, 7
        %s158 = smul.addr %s157, 3
        %s159 = smul.addr %s158, 8
        %s160 = scalar_lea.vmem %s0, %s159
      $region32: #{agrnn_cell_forward.6} parent=27 // pred_fallthru
        _
    $region28: #{agrnn_cell_forward.6} parent=5 // pred_fallthru
      _
    %p161 = scmp.le.s32.totalorder 1, %s10
    %p162 = scmp.lt.s32.totalorder %s10, 9
    %p163 = pnand %p161, %p162
    %p164 = pneg %p163
    // Predicated region
    $region33: #{agrnn_cell_forward.6} parent=5 // pred_check
      _
    $region34: #{agrnn_cell_forward.6} parent=5 // pred_check_branch
      %166 = sbr.rel (%p163) target = $region36
    $region35: #{agrnn_cell_forward.6} parent=5 // pred_region
      %s167 = ssub.s32 %s10, 1
      %p168 = scmp.lt.s32.totalorder %s15, 7
      %s169 = scalar_select %p168, %s15, 7
      %s170 = smul.addr %s169, 3
      %s171 = smul.addr %s170, 8
      %s172 = scalar_lea.vmem %s0, %s171
      %p173 = pneg %p36
      %p174 = pneg %p33
      %p175 = pneg %p57
      %p176 = pneg %p54
      %p177 = pneg %p78
      %p178 = pneg %p75
      %p179 = pneg %p99
      %p180 = pneg %p96
      %p181 = pneg %p125
      %p182 = pneg %p122
      %p183 = scmp.lt.s32.totalorder %s15, 7
      %s184 = scalar_select %p183, %s15, 7
      %s185 = smul.addr %s184, 8
      %s186 = scalar_lea.vmem %s4, %s185
      %p187 = scmp.lt.s32.totalorder %s15, 7
      %s188 = scalar_select %p187, %s15, 7
      %s189 = smul.addr %s188, 3
      %s190 = smul.addr %s189, 8
      %s191 = scalar_lea.vmem %s0, %s190
      %p192 = scmp.lt.s32.totalorder %s15, 7
      %s193 = scalar_select %p192, %s15, 7
      %s194 = smul.addr %s193, 8
      %s195 = scalar_lea.vmem %s4, %s194
      %p196 = scmp.eq.s32.totalorder %s15, 0
      // Predicated region
      $region37: #{agrnn_cell_forward.6} parent=35 // pred_check
        %p197 = pneg %p196
      $region38: #{agrnn_cell_forward.6} parent=35 // pred_check_branch
        %199 = sbr.rel (%p197) target = $region40
      $region39: #{agrnn_cell_forward.6} parent=35 // pred_region
        %v200 = vld [vmem:[%s1] sm:$0xff]
        %201 = vst [vmem:[#allocation2] sm:$0xff] %v200
      $region40: #{agrnn_cell_forward.6} parent=35 // pred_fallthru
        _
      %v202 = vld [vmem:[#allocation2] sm:$0xff]
      %v203 = vld [vmem:[%s2] sm:$0xff]
      %v204 = vld [vmem:[%s2 + $0x8] sm:$0xff]
      %v205 = vld [vmem:[%s2 + $0x10] sm:$0xff]
      %v206 = vld [vmem:[%s2 + $0x18] sm:$0xff]
      %v207 = vld [vmem:[%s2 + $0x20] sm:$0xff]
      %v208 = vld [vmem:[%s2 + $0x28] sm:$0xff]
      %v209 = vld [vmem:[%s2 + $0x30] sm:$0xff]
      %v210 = vld [vmem:[%s2 + $0x38] sm:$0xff]
      %v211 = vld [vmem:[%s2 + $0x40] sm:$0xff]
      %v212 = vld [vmem:[%s2 + $0x48] sm:$0xff]
      %v213 = vld [vmem:[%s2 + $0x50] sm:$0xff]
      %v214 = vld [vmem:[%s2 + $0x58] sm:$0xff]
      %v215 = vld [vmem:[%s2 + $0x60] sm:$0xff]
      %v216 = vld [vmem:[%s2 + $0x68] sm:$0xff]
      %v217 = vld [vmem:[%s2 + $0x70] sm:$0xff]
      %v218 = vld [vmem:[%s2 + $0x78] sm:$0xff]
      %v219 = vld [vmem:[%s2 + $0x80] sm:$0xff]
      %v220 = vld [vmem:[%s2 + $0x88] sm:$0xff]
      %v221 = vld [vmem:[%s2 + $0x90] sm:$0xff]
      %v222 = vld [vmem:[%s2 + $0x98] sm:$0xff]
      %v223 = vld [vmem:[%s2 + $0xa0] sm:$0xff]
      %v224 = vld [vmem:[%s2 + $0xa8] sm:$0xff]
      %v225 = vld [vmem:[%s2 + $0xb0] sm:$0xff]
      %v226 = vld [vmem:[%s2 + $0xb8] sm:$0xff]
      %v227 = vld [vmem:[%s2 + $0xc0] sm:$0xff]
      %v228 = vld [vmem:[%s2 + $0xc8] sm:$0xff]
      %v229 = vld [vmem:[%s2 + $0xd0] sm:$0xff]
      %v230 = vld [vmem:[%s2 + $0xd8] sm:$0xff]
      %v231 = vld [vmem:[%s2 + $0xe0] sm:$0xff]
      %v232 = vld [vmem:[%s2 + $0xe8] sm:$0xff]
      %v233 = vld [vmem:[%s2 + $0xf0] sm:$0xff]
      %v234 = vld [vmem:[%s2 + $0xf8] sm:$0xff]
      %v235 = vld [vmem:[%s2 + $0x100] sm:$0xff]
      %v236 = vld [vmem:[%s2 + $0x108] sm:$0xff]
      %v237 = vld [vmem:[%s2 + $0x110] sm:$0xff]
      %v238 = vld [vmem:[%s2 + $0x118] sm:$0xff]
      %v239 = vld [vmem:[%s2 + $0x120] sm:$0xff]
      %v240 = vld [vmem:[%s2 + $0x128] sm:$0xff]
      %v241 = vld [vmem:[%s2 + $0x130] sm:$0xff]
      %v242 = vld [vmem:[%s2 + $0x138] sm:$0xff]
      %v243 = vld [vmem:[%s2 + $0x140] sm:$0xff]
      %v244 = vld [vmem:[%s2 + $0x148] sm:$0xff]
      %v245 = vld [vmem:[%s2 + $0x150] sm:$0xff]
      %v246 = vld [vmem:[%s2 + $0x158] sm:$0xff]
      %v247 = vld [vmem:[%s2 + $0x160] sm:$0xff]
      %v248 = vld [vmem:[%s2 + $0x168] sm:$0xff]
      %v249 = vld [vmem:[%s2 + $0x170] sm:$0xff]
      %v250 = vld [vmem:[%s2 + $0x178] sm:$0xff]
      %v251 = vld [vmem:[%s3] sm:$0x7]
      %v253 = vlaneseq
      %v254 = vshrl.u32 %v253, 7
      %v255 = vsub.s32 0, %v254
      %v256 = vrot.slane %v251, %v255
      %v257 = vlaneseq
      %v258 = vshrl.u32 %v257, 7
      %v259 = vsub.s32 1, %v258
      %v260 = vrot.slane %v251, %v259
      %v261 = vlaneseq
      %v262 = vshrl.u32 %v261, 7
      %v263 = vsub.s32 2, %v262
      %v264 = vrot.slane %v251, %v263
      %268 = vmatprep.subr.mxu0 %v204
      %269 = vmatpush1.msra.mxu0 %v203
      %270 = vmatprep.subr.mxu0 %v207
      %271 = vmatpush1.msra.mxu0 %v206
      %272 = vmatprep.subr.mxu0 %v210
      %273 = vmatpush1.msra.mxu0 %v209
      %274 = vmatprep.subr.mxu0 %v213
      %275 = vmatpush1.msra.mxu0 %v212
      %276 = vmatprep.subr.mxu0 %v216
      %277 = vmatpush1.msra.mxu0 %v215
      %278 = vmatprep.subr.mxu0 %v219
      %279 = vmatpush1.msra.mxu0 %v218
      %280 = vmatprep.subr.mxu0 %v222
      %281 = vmatpush1.msra.mxu0 %v221
      %282 = vmatprep.subr.mxu0 %v225
      %283 = vmatpush1.msra.mxu0 %v224
      %284 = vmatprep.subr.mxu0 %v228
      %285 = vmatpush1.msra.mxu0 %v227
      %286 = vmatprep.subr.mxu0 %v231
      %287 = vmatpush1.msra.mxu0 %v230
      %288 = vmatprep.subr.mxu0 %v234
      %289 = vmatpush1.msra.mxu0 %v233
      %290 = vmatprep.subr.mxu0 %v237
      %291 = vmatpush1.msra.mxu0 %v236
      %292 = vmatprep.subr.mxu0 %v240
      %293 = vmatpush1.msra.mxu0 %v239
      %294 = vmatprep.subr.mxu0 %v243
      %295 = vmatpush1.msra.mxu0 %v242
      %296 = vmatprep.subr.mxu0 %v246
      %297 = vmatpush1.msra.mxu0 %v245
      %298 = vmatprep.subr.mxu0 %v249
      %299 = vmatpush1.msra.mxu0 %v248
      %300 = vmatprep.subr.mxu0 0.0
      %301 = vmatpush1.msra.mxu0 0.0
      %302 = vmatprep.subr.mxu0 0.0
      %303 = vmatpush1.msra.mxu0 0.0
      %304 = vmatprep.subr.mxu0 0.0
      %305 = vmatpush1.msra.mxu0 0.0
      %306 = vmatprep.subr.mxu0 0.0
      %307 = vmatpush1.msra.mxu0 0.0
      %308 = vmatprep.subr.mxu0 0.0
      %309 = vmatpush1.msra.mxu0 0.0
      %310 = vmatprep.subr.mxu0 0.0
      %311 = vmatpush1.msra.mxu0 0.0
      %312 = vmatprep.subr.mxu0 0.0
      %313 = vmatpush1.msra.mxu0 0.0
      %314 = vmatprep.subr.mxu0 0.0
      %315 = vmatpush1.msra.mxu0 0.0
      %316 = vmatprep.subr.mxu0 0.0
      %317 = vmatpush1.msra.mxu0 0.0
      %318 = vmatprep.subr.mxu0 0.0
      %319 = vmatpush1.msra.mxu0 0.0
      %320 = vmatprep.subr.mxu0 0.0
      %321 = vmatpush1.msra.mxu0 0.0
      %322 = vmatprep.subr.mxu0 0.0
      %323 = vmatpush1.msra.mxu0 0.0
      %324 = vmatprep.subr.mxu0 0.0
      %325 = vmatpush1.msra.mxu0 0.0
      %326 = vmatprep.subr.mxu0 0.0
      %327 = vmatpush1.msra.mxu0 0.0
      %328 = vmatprep.subr.mxu0 0.0
      %329 = vmatpush1.msra.mxu0 0.0
      %330 = vmatprep.subr.mxu0 0.0
      %331 = vmatpush1.msra.mxu0 0.0
      %332 = vmatprep.mubr.f32.mxu0 0.0
      %333 = vmatmul.mubr.f32.gmra.mrb[0].mxu0 %v202
      %v334 = vpop.f32.mrb[0].mxu0
      %v335 = vadd.f32 %v256, %v334
      %v336 = vpop.f32.mrb[0].mxu0
      %v337 = vadd.f32 %v260, %v336
      %338 = vdwg.mxu0
      %339 = vmatprep.subr.mxu0 0.0
      %340 = vmatpush1.msra.mxu0 %v205
      %341 = vmatprep.subr.mxu0 0.0
      %342 = vmatpush1.msra.mxu0 %v208
      %343 = vmatprep.subr.mxu0 0.0
      %344 = vmatpush1.msra.mxu0 %v211
      %345 = vmatprep.subr.mxu0 0.0
      %346 = vmatpush1.msra.mxu0 %v214
      %347 = vmatprep.subr.mxu0 0.0
      %348 = vmatpush1.msra.mxu0 %v217
      %349 = vmatprep.subr.mxu0 0.0
      %350 = vmatpush1.msra.mxu0 %v220
      %351 = vmatprep.subr.mxu0 0.0
      %352 = vmatpush1.msra.mxu0 %v223
      %353 = vmatprep.subr.mxu0 0.0
      %354 = vmatpush1.msra.mxu0 %v226
      %355 = vmatprep.subr.mxu0 0.0
      %356 = vmatpush1.msra.mxu0 %v229
      %357 = vmatprep.subr.mxu0 0.0
      %358 = vmatpush1.msra.mxu0 %v232
      %359 = vmatprep.subr.mxu0 0.0
      %360 = vmatpush1.msra.mxu0 %v235
      %361 = vmatprep.subr.mxu0 0.0
      %362 = vmatpush1.msra.mxu0 %v238
      %363 = vmatprep.subr.mxu0 0.0
      %364 = vmatpush1.msra.mxu0 %v241
      %365 = vmatprep.subr.mxu0 0.0
      %366 = vmatpush1.msra.mxu0 %v244
      %367 = vmatprep.subr.mxu0 0.0
      %368 = vmatpush1.msra.mxu0 %v247
      %369 = vmatprep.subr.mxu0 0.0
      %370 = vmatpush1.msra.mxu0 %v250
      %371 = vmatprep.subr.mxu0 0.0
      %372 = vmatpush1.msra.mxu0 0.0
      %373 = vmatprep.subr.mxu0 0.0
      %374 = vmatpush1.msra.mxu0 0.0
      %375 = vmatprep.subr.mxu0 0.0
      %376 = vmatpush1.msra.mxu0 0.0
      %377 = vmatprep.subr.mxu0 0.0
      %378 = vmatpush1.msra.mxu0 0.0
      %379 = vmatprep.subr.mxu0 0.0
      %380 = vmatpush1.msra.mxu0 0.0
      %381 = vmatprep.subr.mxu0 0.0
      %382 = vmatpush1.msra.mxu0 0.0
      %383 = vmatprep.subr.mxu0 0.0
      %384 = vmatpush1.msra.mxu0 0.0
      %385 = vmatprep.subr.mxu0 0.0
      %386 = vmatpush1.msra.mxu0 0.0
      %387 = vmatprep.subr.mxu0 0.0
      %388 = vmatpush1.msra.mxu0 0.0
      %389 = vmatprep.subr.mxu0 0.0
      %390 = vmatpush1.msra.mxu0 0.0
      %391 = vmatprep.subr.mxu0 0.0
      %392 = vmatpush1.msra.mxu0 0.0
      %393 = vmatprep.subr.mxu0 0.0
      %394 = vmatpush1.msra.mxu0 0.0
      %395 = vmatprep.subr.mxu0 0.0
      %396 = vmatpush1.msra.mxu0 0.0
      %397 = vmatprep.subr.mxu0 0.0
      %398 = vmatpush1.msra.mxu0 0.0
      %399 = vmatprep.subr.mxu0 0.0
      %400 = vmatpush1.msra.mxu0 0.0
      %401 = vmatprep.subr.mxu0 0.0
      %402 = vmatpush1.msra.mxu0 0.0
      %403 = vmatprep.mubr.f32.mxu0 0.0
      %404 = vmatmul.mubr.f32.gmra.mrb[0].mxu0 %v202
      %v405 = vpop.f32.mrb[0].mxu0
      %v406 = vadd.f32 %v264, %v405
      %v407 = vpop.f32.mrb[0].mxu0
      %408 = vdwg.mxu0
      %v409 = vld [vmem:[%s191] sm:$0xff]
      %v410 = vld [vmem:[%s191 + $0x8] sm:$0xff]
      %v411 = vld [vmem:[%s191 + $0x10] sm:$0xff]
      %v412 = vadd.f32 %v409, %v335
      %v413 = vxor.u32 %v412, 2147483648
      %v414 = vmul.f32 %v413, 1.442695
      %v415 = vpow.pop %v414
      %v416 = vadd.f32 %v415, 1.0
      %v417 = vrcp.pop %v416
      %v418 = vmul.f32 1.0, %v417
      %v419 = vadd.f32 %v410, %v337
      %v420 = vxor.u32 %v419, 2147483648
      %v421 = vmul.f32 %v420, 1.442695
      %v422 = vpow.pop %v421
      %v423 = vadd.f32 %v422, 1.0
      %v424 = vrcp.pop %v423
      %v425 = vmul.f32 1.0, %v424
      %v426 = vmul.f32 %v418, %v406
      %v427 = vadd.f32 %v411, %v426
      %v428 = vtanh.pop %v427
      %v429 = vsub.f32 1.0, %v425
      %v430 = vmul.f32 %v429, %v428
      %v431 = vmul.f32 %v425, %v202
      %v432 = vadd.f32 %v430, %v431
      %433 = vst [vmem:[#allocation2] sm:$0xff] %v432
      %434 = vst [vmem:[%s195] sm:$0xff] %v432
      %p435 = scmp.lt.s32.totalorder %s15, 7
      %s436 = scalar_select %p435, %s15, 7
      %s437 = smul.addr %s436, 8
      %s438 = scalar_lea.vmem %s4, %s437
      // Predicated region
      $region41: #{agrnn_cell_forward.6} parent=35 // pred_check
        %p439 = pneg %p122
      $region42: #{agrnn_cell_forward.6} parent=35 // pred_check_branch
        %441 = sbr.rel (%p439) target = $region44
      $region43: #{agrnn_cell_forward.6} parent=35 // pred_region
        _
      $region44: #{agrnn_cell_forward.6} parent=35 // pred_fallthru
        _
    $region36: #{agrnn_cell_forward.6} parent=5 // pred_fallthru
      _
    %p442 = scmp.le.s32.totalorder 2, %s10
    // Predicated region
    $region45: #{agrnn_cell_forward.6} parent=5 // pred_check
      %p443 = pneg %p442
    $region46: #{agrnn_cell_forward.6} parent=5 // pred_check_branch
      %445 = sbr.rel (%p443) target = $region48
    $region47: #{agrnn_cell_forward.6} parent=5 // pred_region
      %s446 = ssub.s32 %s10, 2
      // Predicated region
      $region49: #{agrnn_cell_forward.6} parent=47 // pred_check
        %p447 = pneg %p128
      $region50: #{agrnn_cell_forward.6} parent=47 // pred_check_branch
        %449 = sbr.rel (%p447) target = $region52
      $region51: #{agrnn_cell_forward.6} parent=47 // pred_region
        %p450 = scmp.lt.s32.totalorder %s16, 7
        %s451 = scalar_select %p450, %s16, 7
        %s452 = smul.addr %s451, 8
        %s453 = scalar_lea.vmem %s4, %s452
      $region52: #{agrnn_cell_forward.6} parent=47 // pred_fallthru
        _
    $region48: #{agrnn_cell_forward.6} parent=5 // pred_fallthru
      _
  $region6: #{agrnn_cell_forward.6} parent=0 // loop_footer
    %s14 = sadd.s32 1, %s10
  $region7: #{agrnn_cell_forward.6} parent=0 // loop_footer_branch
    %9 = sbr.rel target = $region3
  $region8: #{agrnn_cell_forward.6} parent=0 // loop_exit
    _

// kernel: agrnn_cell_forward.9
$region0: #{agrnn_cell_forward.9}
  #allocation0 [shape = 'u32[]', space=smem, size = 0x4, offset = 0x4, fixed_abs, tag = 'smem constant byte address 0x4 - core index']
  #allocation1 [shape = 'u32[144,128]{1,0:T(1,128)}', space=vmem, size = 0x12000, scoped, tag = 'internal scratch']
  %s0 = inlined_call_operand.vmem [shape: f32[64,128], index: 0, kind: input, shape index: {}]
  %s1 = inlined_call_operand.vmem [shape: f32[64,1], index: 1, kind: input, shape index: {}]
  %s2 = inlined_call_operand.vmem [shape: f32[128,128], index: 2, kind: input, shape index: {}]
  %s3 = inlined_call_operand.vmem [shape: f32[1,128], index: 3, kind: input, shape index: {}]
  %s4 = inlined_call_operand.vmem [shape: f32[128,128], index: 4, kind: input, shape index: {}]
  %s5 = inlined_call_operand.vmem [shape: f32[1,128], index: 5, kind: input, shape index: {}]
  %s6 = inlined_call_operand.vmem [shape: f32[64,128], index: 6, kind: output, shape index: {}]
  %s7 = sld [smem:[#allocation0]]
  $region57: #{agrnn_cell_forward.9} parent=0
    _
  %s9 = ssub.s32 1, %s7
  %s10 = scalar_select 0, %s9, %s7
  loop: start=0, step=1, limit=4
  $region2: #{agrnn_cell_forward.9} parent=0 // loop_pre_header
    _
  $region3: #{agrnn_cell_forward.9} parent=0 // loop_header
    %s12 = sphi 0, %s16
    %p13 = scmp.ge.s32.totalorder %s12, 4
    %s22 = sphi 0, %s24
    %s25 = sphi 0, %s22
    %s26 = sphi 0, %s25
    %s42 = sphi 0, %s26
    %s48 = sphi 0, %s50
    %s51 = sphi 0, %s48
    %s52 = sphi 0, %s51
    %s68 = sphi 0, %s52
    %s72 = sphi 0, %s72
    %s74 = sphi 0, %s72
    %s75 = sphi 0, %s74
    %s89 = sphi 0, %s75
    %s93 = sphi 0, %s93
    %s95 = sphi 0, %s93
    %s96 = sphi 0, %s95
    %s110 = sphi 0, %s96
    %s114 = sphi 0, %s114
    %s116 = sphi 0, %s114
    %s117 = sphi 0, %s116
    %s131 = sphi 0, %s117
    %s135 = sphi 0, %s135
    %s137 = sphi 0, %s135
    %s138 = sphi 0, %s137
    %s152 = sphi 0, %s138
    %s158 = sphi 0, %s160
    %s161 = sphi 0, %s158
    %s162 = sphi 0, %s161
    %s178 = sphi 0, %s162
  $region4: #{agrnn_cell_forward.9} parent=0 // loop_header_branch
    %15 = sbr.rel (%p13) target = $region8
  $region5: #{agrnn_cell_forward.9} parent=0 // loop_body
    %s17 = ssub.s32 %s12, 1
    %s18 = ssub.s32 %s12, 2
    %s19 = sadd.s32 %s12, 1
    %s20 = ssub.s32 %s12, %s19
    %p21 = scmp.eq.s32.totalorder %s20, 0
    %s23 = sadd.s32 %s22, 1
    %s24 = scalar_select %p21, %s22, %s23
    %p27 = pneg %p21
    %p28 = scmp.eq.s32.totalorder %s12, 1
    %p29 = por %p27, %p28
    %p30 = scmp.ne.s32.totalorder %s22, %s25
    %p31 = scmp.eq.s32.totalorder %s12, 0
    %p32 = por %p30, %p31
    %p33 = scmp.ne.s32.totalorder %s22, %s25
    %p34 = scmp.eq.s32.totalorder %s17, 1
    %p35 = por %p33, %p34
    %p36 = scmp.ne.s32.totalorder %s25, %s26
    %p37 = scmp.eq.s32.totalorder %s17, 0
    %p38 = por %p36, %p37
    %p39 = scmp.ne.s32.totalorder %s25, %s26
    %p40 = scmp.eq.s32.totalorder %s18, 1
    %p41 = por %p39, %p40
    %p43 = scmp.ne.s32.totalorder %s26, %s42
    %p44 = scmp.eq.s32.totalorder %s18, 0
    %p45 = por %p43, %p44
    %s46 = ssub.s32 %s12, %s19
    %p47 = scmp.eq.s32.totalorder %s46, 0
    %s49 = sadd.s32 %s48, 1
    %s50 = scalar_select %p47, %s48, %s49
    %p53 = pneg %p47
    %p54 = scmp.eq.s32.totalorder %s12, 1
    %p55 = por %p53, %p54
    %p56 = scmp.ne.s32.totalorder %s48, %s51
    %p57 = scmp.eq.s32.totalorder %s12, 0
    %p58 = por %p56, %p57
    %p59 = scmp.ne.s32.totalorder %s48, %s51
    %p60 = scmp.eq.s32.totalorder %s17, 1
    %p61 = por %p59, %p60
    %p62 = scmp.ne.s32.totalorder %s51, %s52
    %p63 = scmp.eq.s32.totalorder %s17, 0
    %p64 = por %p62, %p63
    %p65 = scmp.ne.s32.totalorder %s51, %s52
    %p66 = scmp.eq.s32.totalorder %s18, 1
    %p67 = por %p65, %p66
    %p69 = scmp.ne.s32.totalorder %s52, %s68
    %p70 = scmp.eq.s32.totalorder %s18, 0
    %p71 = por %p69, %p70
    %s73 = sadd.s32 %s72, 1
    %p76 = scmp.eq.s32.totalorder %s12, 1
    %p77 = scmp.ne.s32.totalorder %s72, %s74
    %p78 = scmp.eq.s32.totalorder %s12, 0
    %p79 = por %p77, %p78
    %p80 = scmp.ne.s32.totalorder %s72, %s74
    %p81 = scmp.eq.s32.totalorder %s17, 1
    %p82 = por %p80, %p81
    %p83 = scmp.ne.s32.totalorder %s74, %s75
    %p84 = scmp.eq.s32.totalorder %s17, 0
    %p85 = por %p83, %p84
    %p86 = scmp.ne.s32.totalorder %s74, %s75
    %p87 = scmp.eq.s32.totalorder %s18, 1
    %p88 = por %p86, %p87
    %p90 = scmp.ne.s32.totalorder %s75, %s89
    %p91 = scmp.eq.s32.totalorder %s18, 0
    %p92 = por %p90, %p91
    %s94 = sadd.s32 %s93, 1
    %p97 = scmp.eq.s32.totalorder %s12, 1
    %p98 = scmp.ne.s32.totalorder %s93, %s95
    %p99 = scmp.eq.s32.totalorder %s12, 0
    %p100 = por %p98, %p99
    %p101 = scmp.ne.s32.totalorder %s93, %s95
    %p102 = scmp.eq.s32.totalorder %s17, 1
    %p103 = por %p101, %p102
    %p104 = scmp.ne.s32.totalorder %s95, %s96
    %p105 = scmp.eq.s32.totalorder %s17, 0
    %p106 = por %p104, %p105
    %p107 = scmp.ne.s32.totalorder %s95, %s96
    %p108 = scmp.eq.s32.totalorder %s18, 1
    %p109 = por %p107, %p108
    %p111 = scmp.ne.s32.totalorder %s96, %s110
    %p112 = scmp.eq.s32.totalorder %s18, 0
    %p113 = por %p111, %p112
    %s115 = sadd.s32 %s114, 1
    %p118 = scmp.eq.s32.totalorder %s12, 1
    %p119 = scmp.ne.s32.totalorder %s114, %s116
    %p120 = scmp.eq.s32.totalorder %s12, 0
    %p121 = por %p119, %p120
    %p122 = scmp.ne.s32.totalorder %s114, %s116
    %p123 = scmp.eq.s32.totalorder %s17, 1
    %p124 = por %p122, %p123
    %p125 = scmp.ne.s32.totalorder %s116, %s117
    %p126 = scmp.eq.s32.totalorder %s17, 0
    %p127 = por %p125, %p126
    %p128 = scmp.ne.s32.totalorder %s116, %s117
    %p129 = scmp.eq.s32.totalorder %s18, 1
    %p130 = por %p128, %p129
    %p132 = scmp.ne.s32.totalorder %s117, %s131
    %p133 = scmp.eq.s32.totalorder %s18, 0
    %p134 = por %p132, %p133
    %s136 = sadd.s32 %s135, 1
    %p139 = scmp.eq.s32.totalorder %s12, 1
    %p140 = scmp.ne.s32.totalorder %s135, %s137
    %p141 = scmp.eq.s32.totalorder %s12, 0
    %p142 = por %p140, %p141
    %p143 = scmp.ne.s32.totalorder %s135, %s137
    %p144 = scmp.eq.s32.totalorder %s17, 1
    %p145 = por %p143, %p144
    %p146 = scmp.ne.s32.totalorder %s137, %s138
    %p147 = scmp.eq.s32.totalorder %s17, 0
    %p148 = por %p146, %p147
    %p149 = scmp.ne.s32.totalorder %s137, %s138
    %p150 = scmp.eq.s32.totalorder %s18, 1
    %p151 = por %p149, %p150
    %p153 = scmp.ne.s32.totalorder %s138, %s152
    %p154 = scmp.eq.s32.totalorder %s18, 0
    %p155 = por %p153, %p154
    %s156 = ssub.s32 %s12, %s19
    %p157 = scmp.eq.s32.totalorder %s156, 0
    %s159 = sadd.s32 %s158, 1
    %s160 = scalar_select %p157, %s158, %s159
    %p163 = pneg %p157
    %p164 = scmp.eq.s32.totalorder %s12, 1
    %p165 = por %p163, %p164
    %p166 = scmp.ne.s32.totalorder %s158, %s161
    %p167 = scmp.eq.s32.totalorder %s12, 0
    %p168 = por %p166, %p167
    %p169 = scmp.ne.s32.totalorder %s158, %s161
    %p170 = scmp.eq.s32.totalorder %s17, 1
    %p171 = por %p169, %p170
    %p172 = scmp.ne.s32.totalorder %s161, %s162
    %p173 = scmp.eq.s32.totalorder %s17, 0
    %p174 = por %p172, %p173
    %p175 = scmp.ne.s32.totalorder %s161, %s162
    %p176 = scmp.eq.s32.totalorder %s18, 1
    %p177 = por %p175, %p176
    %p179 = scmp.ne.s32.totalorder %s162, %s178
    %p180 = scmp.eq.s32.totalorder %s18, 0
    %p181 = por %p179, %p180
    %p182 = scmp.le.s32.totalorder 1, %s12
    %p183 = scmp.lt.s32.totalorder %s12, 3
    %p184 = pnand %p182, %p183
    %p185 = pneg %p184
    // Predicated region
    $region9: #{agrnn_cell_forward.9} parent=5 // pred_check
      _
    $region10: #{agrnn_cell_forward.9} parent=5 // pred_check_branch
      %187 = sbr.rel (%p184) target = $region12
    $region11: #{agrnn_cell_forward.9} parent=5 // pred_region
      %s188 = ssub.s32 %s12, 1
      // Predicated region
      $region13: #{agrnn_cell_forward.9} parent=11 // pred_check
        %p189 = pneg %p85
      $region14: #{agrnn_cell_forward.9} parent=11 // pred_check_branch
        %191 = sbr.rel (%p189) target = $region16
      $region15: #{agrnn_cell_forward.9} parent=11 // pred_region
        _
      $region16: #{agrnn_cell_forward.9} parent=11 // pred_fallthru
        _
      // Predicated region
      $region17: #{agrnn_cell_forward.9} parent=11 // pred_check
        %p192 = pneg %p106
      $region18: #{agrnn_cell_forward.9} parent=11 // pred_check_branch
        %194 = sbr.rel (%p192) target = $region20
      $region19: #{agrnn_cell_forward.9} parent=11 // pred_region
        _
      $region20: #{agrnn_cell_forward.9} parent=11 // pred_fallthru
        _
      // Predicated region
      $region21: #{agrnn_cell_forward.9} parent=11 // pred_check
        %p195 = pneg %p127
      $region22: #{agrnn_cell_forward.9} parent=11 // pred_check_branch
        %197 = sbr.rel (%p195) target = $region24
      $region23: #{agrnn_cell_forward.9} parent=11 // pred_region
        _
      $region24: #{agrnn_cell_forward.9} parent=11 // pred_fallthru
        _
      // Predicated region
      $region25: #{agrnn_cell_forward.9} parent=11 // pred_check
        %p198 = pneg %p148
      $region26: #{agrnn_cell_forward.9} parent=11 // pred_check_branch
        %200 = sbr.rel (%p198) target = $region28
      $region27: #{agrnn_cell_forward.9} parent=11 // pred_region
        _
      $region28: #{agrnn_cell_forward.9} parent=11 // pred_fallthru
        _
    $region12: #{agrnn_cell_forward.9} parent=5 // pred_fallthru
      _
    %p201 = scmp.lt.s32.totalorder %s12, 2
    // Predicated region
    $region29: #{agrnn_cell_forward.9} parent=5 // pred_check
      %p202 = pneg %p201
    $region30: #{agrnn_cell_forward.9} parent=5 // pred_check_branch
      %204 = sbr.rel (%p202) target = $region32
    $region31: #{agrnn_cell_forward.9} parent=5 // pred_region
      // Predicated region
      $region33: #{agrnn_cell_forward.9} parent=31 // pred_check
        %p205 = pneg %p32
      $region34: #{agrnn_cell_forward.9} parent=31 // pred_check_branch
        %207 = sbr.rel (%p205) target = $region36
      $region35: #{agrnn_cell_forward.9} parent=31 // pred_region
        %s208 = smul.u32 4, %s12
        %p209 = scmp.lt.s32.totalorder %s208, 7
        %s210 = scalar_select %p209, %s208, 7
        %s211 = smul.addr %s210, 8
        %s212 = scalar_lea.vmem %s0, %s211
        %s213 = smul.u32 4, %s12
      $region36: #{agrnn_cell_forward.9} parent=31 // pred_fallthru
        _
      // Predicated region
      $region37: #{agrnn_cell_forward.9} parent=31 // pred_check
        %p214 = pneg %p58
      $region38: #{agrnn_cell_forward.9} parent=31 // pred_check_branch
        %216 = sbr.rel (%p214) target = $region40
      $region39: #{agrnn_cell_forward.9} parent=31 // pred_region
        %s217 = smul.u32 4, %s12
        %p218 = scmp.lt.s32.totalorder %s217, 7
        %s219 = scalar_select %p218, %s217, 7
        %s220 = smul.addr %s219, 8
        %s221 = scalar_lea.vmem %s1, %s220
        %s222 = smul.u32 4, %s12
      $region40: #{agrnn_cell_forward.9} parent=31 // pred_fallthru
        _
    $region32: #{agrnn_cell_forward.9} parent=5 // pred_fallthru
      _
    %p223 = scmp.le.s32.totalorder 1, %s12
    %p224 = scmp.lt.s32.totalorder %s12, 3
    %p225 = pnand %p223, %p224
    %p226 = pneg %p225
    // Predicated region
    $region41: #{agrnn_cell_forward.9} parent=5 // pred_check
      _
    $region42: #{agrnn_cell_forward.9} parent=5 // pred_check_branch
      %228 = sbr.rel (%p225) target = $region44
    $region43: #{agrnn_cell_forward.9} parent=5 // pred_region
      %s229 = ssub.s32 %s12, 1
      %s230 = smul.u32 4, %s17
      %p231 = scmp.lt.s32.totalorder %s230, 7
      %s232 = scalar_select %p231, %s230, 7
      %s233 = smul.addr %s232, 8
      %s234 = scalar_lea.vmem %s0, %s233
      %p235 = pneg %p38
      %p236 = pneg %p35
      %s237 = smul.u32 4, %s17
      %p238 = scmp.lt.s32.totalorder %s237, 7
      %s239 = scalar_select %p238, %s237, 7
      %s240 = smul.addr %s239, 8
      %s241 = scalar_lea.vmem %s1, %s240
      %p242 = pneg %p64
      %p243 = pneg %p61
      %p244 = pneg %p85
      %p245 = pneg %p82
      %p246 = pneg %p106
      %p247 = pneg %p103
      %p248 = pneg %p127
      %p249 = pneg %p124
      %p250 = pneg %p148
      %p251 = pneg %p145
      %p252 = pneg %p174
      %p253 = pneg %p171
      %s254 = smul.u32 4, %s17
      %p255 = scmp.lt.s32.totalorder %s254, 7
      %s256 = scalar_select %p255, %s254, 7
      %s257 = smul.addr %s256, 8
      %s258 = scalar_lea.vmem %s6, %s257
      %s259 = smul.u32 4, %s17
      %p260 = scmp.lt.s32.totalorder %s259, 7
      %s261 = scalar_select %p260, %s259, 7
      %s262 = smul.addr %s261, 8
      %s263 = scalar_lea.vmem %s0, %s262
      %s264 = smul.u32 4, %s17
      %s265 = smul.u32 4, %s17
      %p266 = scmp.lt.s32.totalorder %s265, 7
      %s267 = scalar_select %p266, %s265, 7
      %s268 = smul.addr %s267, 8
      %s269 = scalar_lea.vmem %s1, %s268
      %s270 = smul.u32 4, %s17
      %s271 = smul.u32 4, %s17
      %p272 = scmp.lt.s32.totalorder %s271, 7
      %s273 = scalar_select %p272, %s271, 7
      %s274 = smul.addr %s273, 8
      %s275 = scalar_lea.vmem %s6, %s274
      %s276 = smul.u32 4, %s17
      %v277 = vld [vmem:[%s263] sm:$0xff]
      %v278 = vld [vmem:[%s263 + $0x8] sm:$0xff]
      %v279 = vld [vmem:[%s263 + $0x10] sm:$0xff]
      %v280 = vld [vmem:[%s263 + $0x18] sm:$0xff]
      %v281 = vld [vmem:[%s269] sm:$0xff]
      %v282 = vld [vmem:[%s269 + $0x8] sm:$0xff]
      %v283 = vld [vmem:[%s269 + $0x10] sm:$0xff]
      %v284 = vld [vmem:[%s269 + $0x18] sm:$0xff]
      %286 = vset.pattern.permute.xlu0 0
      %287 = vperm.xlu0 %286, %v281
      %v288 = vpop.permute.xlu0 %287
      %291 = vset.pattern.permute.xlu0 0
      %292 = vperm.xlu0 %291, %v282
      %v293 = vpop.permute.xlu0 %292
      %296 = vset.pattern.permute.xlu0 0
      %297 = vperm.xlu0 %296, %v283
      %v298 = vpop.permute.xlu0 %297
      %301 = vset.pattern.permute.xlu0 0
      %302 = vperm.xlu0 %301, %v284
      %v303 = vpop.permute.xlu0 %302
      %v305 = vmul.f32 %v277, %v288
      %v306 = vmul.f32 %v278, %v293
      %v307 = vmul.f32 %v279, %v298
      %v308 = vmul.f32 %v280, %v303
      %v309 = vld [vmem:[%s2] sm:$0xff]
      %v310 = vld [vmem:[%s2 + $0x8] sm:$0xff]
      %v311 = vld [vmem:[%s2 + $0x10] sm:$0xff]
      %v312 = vld [vmem:[%s2 + $0x18] sm:$0xff]
      %v313 = vld [vmem:[%s2 + $0x20] sm:$0xff]
      %v314 = vld [vmem:[%s2 + $0x28] sm:$0xff]
      %v315 = vld [vmem:[%s2 + $0x30] sm:$0xff]
      %v316 = vld [vmem:[%s2 + $0x38] sm:$0xff]
      %v317 = vld [vmem:[%s2 + $0x40] sm:$0xff]
      %v318 = vld [vmem:[%s2 + $0x48] sm:$0xff]
      %v319 = vld [vmem:[%s2 + $0x50] sm:$0xff]
      %v320 = vld [vmem:[%s2 + $0x58] sm:$0xff]
      %v321 = vld [vmem:[%s2 + $0x60] sm:$0xff]
      %v322 = vld [vmem:[%s2 + $0x68] sm:$0xff]
      %v323 = vld [vmem:[%s2 + $0x70] sm:$0xff]
      %v324 = vld [vmem:[%s2 + $0x78] sm:$0xff]
      %v325 = vld [vmem:[%s3] sm:$0x1]
      %v327 = vlaneseq
      %v328 = vshrl.u32 %v327, 7
      %v329 = vsub.s32 0, %v328
      %v330 = vrot.slane %v325, %v329
      %332 = vmatprep.subr.mxu0 0.0
      %333 = vmatpush1.msra.mxu0 %v309
      %334 = vmatprep.subr.mxu0 0.0
      %335 = vmatpush1.msra.mxu0 %v310
      %336 = vmatprep.subr.mxu0 0.0
      %337 = vmatpush1.msra.mxu0 %v311
      %338 = vmatprep.subr.mxu0 0.0
      %339 = vmatpush1.msra.mxu0 %v312
      %340 = vmatprep.subr.mxu0 0.0
      %341 = vmatpush1.msra.mxu0 %v313
      %342 = vmatprep.subr.mxu0 0.0
      %343 = vmatpush1.msra.mxu0 %v314
      %344 = vmatprep.subr.mxu0 0.0
      %345 = vmatpush1.msra.mxu0 %v315
      %346 = vmatprep.subr.mxu0 0.0
      %347 = vmatpush1.msra.mxu0 %v316
      %348 = vmatprep.subr.mxu0 0.0
      %349 = vmatpush1.msra.mxu0 %v317
      %350 = vmatprep.subr.mxu0 0.0
      %351 = vmatpush1.msra.mxu0 %v318
      %352 = vmatprep.subr.mxu0 0.0
      %353 = vmatpush1.msra.mxu0 %v319
      %354 = vmatprep.subr.mxu0 0.0
      %355 = vmatpush1.msra.mxu0 %v320
      %356 = vmatprep.subr.mxu0 0.0
      %357 = vmatpush1.msra.mxu0 %v321
      %358 = vmatprep.subr.mxu0 0.0
      %359 = vmatpush1.msra.mxu0 %v322
      %360 = vmatprep.subr.mxu0 0.0
      %361 = vmatpush1.msra.mxu0 %v323
      %362 = vmatprep.subr.mxu0 0.0
      %363 = vmatpush1.msra.mxu0 %v324
      %364 = vmatprep.subr.mxu0 0.0
      %365 = vmatpush1.msra.mxu0 0.0
      %366 = vmatprep.subr.mxu0 0.0
      %367 = vmatpush1.msra.mxu0 0.0
      %368 = vmatprep.subr.mxu0 0.0
      %369 = vmatpush1.msra.mxu0 0.0
      %370 = vmatprep.subr.mxu0 0.0
      %371 = vmatpush1.msra.mxu0 0.0
      %372 = vmatprep.subr.mxu0 0.0
      %373 = vmatpush1.msra.mxu0 0.0
      %374 = vmatprep.subr.mxu0 0.0
      %375 = vmatpush1.msra.mxu0 0.0
      %376 = vmatprep.subr.mxu0 0.0
      %377 = vmatpush1.msra.mxu0 0.0
      %378 = vmatprep.subr.mxu0 0.0
      %379 = vmatpush1.msra.mxu0 0.0
      %380 = vmatprep.subr.mxu0 0.0
      %381 = vmatpush1.msra.mxu0 0.0
      %382 = vmatprep.subr.mxu0 0.0
      %383 = vmatpush1.msra.mxu0 0.0
      %384 = vmatprep.subr.mxu0 0.0
      %385 = vmatpush1.msra.mxu0 0.0
      %386 = vmatprep.subr.mxu0 0.0
      %387 = vmatpush1.msra.mxu0 0.0
      %388 = vmatprep.subr.mxu0 0.0
      %389 = vmatpush1.msra.mxu0 0.0
      %390 = vmatprep.subr.mxu0 0.0
      %391 = vmatpush1.msra.mxu0 0.0
      %392 = vmatprep.subr.mxu0 0.0
      %393 = vmatpush1.msra.mxu0 0.0
      %394 = vmatprep.subr.mxu0 0.0
      %395 = vmatpush1.msra.mxu0 0.0
      %396 = vmatprep.mubr.f32.mxu0 0.0
      %397 = vmatmul.mubr.f32.gmra.mrb[0].mxu0 %v305
      %v398 = vpop.f32.mrb[0].mxu0
      %v399 = vadd.f32 %v330, %v398
      %v400 = vpop.f32.mrb[0].mxu0
      %401 = vmatprep.mubr.f32.mxu0 0.0
      %402 = vmatmul.mubr.f32.gmra.mrb[0].mxu0 %v306
      %v403 = vpop.f32.mrb[0].mxu0
      %v404 = vadd.f32 %v330, %v403
      %v405 = vpop.f32.mrb[0].mxu0
      %406 = vmatprep.mubr.f32.mxu0 0.0
      %407 = vmatmul.mubr.f32.gmra.mrb[0].mxu0 %v307
      %v408 = vpop.f32.mrb[0].mxu0
      %v409 = vadd.f32 %v330, %v408
      %v410 = vpop.f32.mrb[0].mxu0
      %411 = vmatprep.mubr.f32.mxu0 0.0
      %412 = vmatmul.mubr.f32.gmra.mrb[0].mxu0 %v308
      %v413 = vpop.f32.mrb[0].mxu0
      %v414 = vadd.f32 %v330, %v413
      %v415 = vpop.f32.mrb[0].mxu0
      %416 = vdwg.mxu0
      %v417 = vmax.f32 %v399, 0.0
      %v418 = vmax.f32 %v404, 0.0
      %v419 = vmax.f32 %v409, 0.0
      %v420 = vmax.f32 %v414, 0.0
      %v421 = vld [vmem:[%s4] sm:$0xff]
      %v422 = vld [vmem:[%s4 + $0x8] sm:$0xff]
      %v423 = vld [vmem:[%s4 + $0x10] sm:$0xff]
      %v424 = vld [vmem:[%s4 + $0x18] sm:$0xff]
      %v425 = vld [vmem:[%s4 + $0x20] sm:$0xff]
      %v426 = vld [vmem:[%s4 + $0x28] sm:$0xff]
      %v427 = vld [vmem:[%s4 + $0x30] sm:$0xff]
      %v428 = vld [vmem:[%s4 + $0x38] sm:$0xff]
      %v429 = vld [vmem:[%s4 + $0x40] sm:$0xff]
      %v430 = vld [vmem:[%s4 + $0x48] sm:$0xff]
      %v431 = vld [vmem:[%s4 + $0x50] sm:$0xff]
      %v432 = vld [vmem:[%s4 + $0x58] sm:$0xff]
      %v433 = vld [vmem:[%s4 + $0x60] sm:$0xff]
      %v434 = vld [vmem:[%s4 + $0x68] sm:$0xff]
      %v435 = vld [vmem:[%s4 + $0x70] sm:$0xff]
      %v436 = vld [vmem:[%s4 + $0x78] sm:$0xff]
      %v437 = vld [vmem:[%s5] sm:$0x1]
      %v439 = vlaneseq
      %v440 = vshrl.u32 %v439, 7
      %v441 = vsub.s32 0, %v440
      %v442 = vrot.slane %v437, %v441
      %444 = vmatprep.subr.mxu0 0.0
      %445 = vmatpush1.msra.mxu0 %v421
      %446 = vmatprep.subr.mxu0 0.0
      %447 = vmatpush1.msra.mxu0 %v422
      %448 = vmatprep.subr.mxu0 0.0
      %449 = vmatpush1.msra.mxu0 %v423
      %450 = vmatprep.subr.mxu0 0.0
      %451 = vmatpush1.msra.mxu0 %v424
      %452 = vmatprep.subr.mxu0 0.0
      %453 = vmatpush1.msra.mxu0 %v425
      %454 = vmatprep.subr.mxu0 0.0
      %455 = vmatpush1.msra.mxu0 %v426
      %456 = vmatprep.subr.mxu0 0.0
      %457 = vmatpush1.msra.mxu0 %v427
      %458 = vmatprep.subr.mxu0 0.0
      %459 = vmatpush1.msra.mxu0 %v428
      %460 = vmatprep.subr.mxu0 0.0
      %461 = vmatpush1.msra.mxu0 %v429
      %462 = vmatprep.subr.mxu0 0.0
      %463 = vmatpush1.msra.mxu0 %v430
      %464 = vmatprep.subr.mxu0 0.0
      %465 = vmatpush1.msra.mxu0 %v431
      %466 = vmatprep.subr.mxu0 0.0
      %467 = vmatpush1.msra.mxu0 %v432
      %468 = vmatprep.subr.mxu0 0.0
      %469 = vmatpush1.msra.mxu0 %v433
      %470 = vmatprep.subr.mxu0 0.0
      %471 = vmatpush1.msra.mxu0 %v434
      %472 = vmatprep.subr.mxu0 0.0
      %473 = vmatpush1.msra.mxu0 %v435
      %474 = vmatprep.subr.mxu0 0.0
      %475 = vmatpush1.msra.mxu0 %v436
      %476 = vmatprep.subr.mxu0 0.0
      %477 = vmatpush1.msra.mxu0 0.0
      %478 = vmatprep.subr.mxu0 0.0
      %479 = vmatpush1.msra.mxu0 0.0
      %480 = vmatprep.subr.mxu0 0.0
      %481 = vmatpush1.msra.mxu0 0.0
      %482 = vmatprep.subr.mxu0 0.0
      %483 = vmatpush1.msra.mxu0 0.0
      %484 = vmatprep.subr.mxu0 0.0
      %485 = vmatpush1.msra.mxu0 0.0
      %486 = vmatprep.subr.mxu0 0.0
      %487 = vmatpush1.msra.mxu0 0.0
      %488 = vmatprep.subr.mxu0 0.0
      %489 = vmatpush1.msra.mxu0 0.0
      %490 = vmatprep.subr.mxu0 0.0
      %491 = vmatpush1.msra.mxu0 0.0
      %492 = vmatprep.subr.mxu0 0.0
      %493 = vmatpush1.msra.mxu0 0.0
      %494 = vmatprep.subr.mxu0 0.0
      %495 = vmatpush1.msra.mxu0 0.0
      %496 = vmatprep.subr.mxu0 0.0
      %497 = vmatpush1.msra.mxu0 0.0
      %498 = vmatprep.subr.mxu0 0.0
      %499 = vmatpush1.msra.mxu0 0.0
      %500 = vmatprep.subr.mxu0 0.0
      %501 = vmatpush1.msra.mxu0 0.0
      %502 = vmatprep.subr.mxu0 0.0
      %503 = vmatpush1.msra.mxu0 0.0
      %504 = vmatprep.subr.mxu0 0.0
      %505 = vmatpush1.msra.mxu0 0.0
      %506 = vmatprep.subr.mxu0 0.0
      %507 = vmatpush1.msra.mxu0 0.0
      %508 = vmatprep.mubr.f32.mxu0 0.0
      %509 = vmatmul.mubr.f32.gmra.mrb[0].mxu0 %v417
      %v510 = vpop.f32.mrb[0].mxu0
      %v511 = vadd.f32 %v442, %v510
      %v512 = vpop.f32.mrb[0].mxu0
      %513 = vmatprep.mubr.f32.mxu0 0.0
      %514 = vmatmul.mubr.f32.gmra.mrb[0].mxu0 %v418
      %v515 = vpop.f32.mrb[0].mxu0
      %v516 = vadd.f32 %v442, %v515
      %v517 = vpop.f32.mrb[0].mxu0
      %518 = vmatprep.mubr.f32.mxu0 0.0
      %519 = vmatmul.mubr.f32.gmra.mrb[0].mxu0 %v419
      %v520 = vpop.f32.mrb[0].mxu0
      %v521 = vadd.f32 %v442, %v520
      %v522 = vpop.f32.mrb[0].mxu0
      %523 = vmatprep.mubr.f32.mxu0 0.0
      %524 = vmatmul.mubr.f32.gmra.mrb[0].mxu0 %v420
      %v525 = vpop.f32.mrb[0].mxu0
      %v526 = vadd.f32 %v442, %v525
      %v527 = vpop.f32.mrb[0].mxu0
      %528 = vdwg.mxu0
      %529 = vst [vmem:[%s275] sm:$0xff] %v511
      %530 = vst [vmem:[%s275 + $0x8] sm:$0xff] %v516
      %531 = vst [vmem:[%s275 + $0x10] sm:$0xff] %v521
      %532 = vst [vmem:[%s275 + $0x18] sm:$0xff] %v526
      %s533 = smul.u32 4, %s17
      %p534 = scmp.lt.s32.totalorder %s533, 7
      %s535 = scalar_select %p534, %s533, 7
      %s536 = smul.addr %s535, 8
      %s537 = scalar_lea.vmem %s6, %s536
      // Predicated region
      $region45: #{agrnn_cell_forward.9} parent=43 // pred_check
        %p538 = pneg %p171
      $region46: #{agrnn_cell_forward.9} parent=43 // pred_check_branch
        %540 = sbr.rel (%p538) target = $region48
      $region47: #{agrnn_cell_forward.9} parent=43 // pred_region
        %s541 = smul.u32 4, %s17
      $region48: #{agrnn_cell_forward.9} parent=43 // pred_fallthru
        _
    $region44: #{agrnn_cell_forward.9} parent=5 // pred_fallthru
      _
    %p542 = scmp.le.s32.totalorder 2, %s12
    // Predicated region
    $region49: #{agrnn_cell_forward.9} parent=5 // pred_check
      %p543 = pneg %p542
    $region50: #{agrnn_cell_forward.9} parent=5 // pred_check_branch
      %545 = sbr.rel (%p543) target = $region52
    $region51: #{agrnn_cell_forward.9} parent=5 // pred_region
      %s546 = ssub.s32 %s12, 2
      // Predicated region
      $region53: #{agrnn_cell_forward.9} parent=51 // pred_check
        %p547 = pneg %p177
      $region54: #{agrnn_cell_forward.9} parent=51 // pred_check_branch
        %549 = sbr.rel (%p547) target = $region56
      $region55: #{agrnn_cell_forward.9} parent=51 // pred_region
        %s550 = smul.u32 4, %s18
        %p551 = scmp.lt.s32.totalorder %s550, 7
        %s552 = scalar_select %p551, %s550, 7
        %s553 = smul.addr %s552, 8
        %s554 = scalar_lea.vmem %s6, %s553
      $region56: #{agrnn_cell_forward.9} parent=51 // pred_fallthru
        _
    $region52: #{agrnn_cell_forward.9} parent=5 // pred_fallthru
      _
  $region6: #{agrnn_cell_forward.9} parent=0 // loop_footer
    %s16 = sadd.s32 1, %s12
  $region7: #{agrnn_cell_forward.9} parent=0 // loop_footer_branch
    %11 = sbr.rel target = $region3
  $region8: #{agrnn_cell_forward.9} parent=0 // loop_exit
    _

</llo_original>
